<compile_context>
chip_gen: v7x
topology: tpu7x:2x2x1
jax: 0.10.0
libtpu: 0.0.40
codegen_flags: <defaults>
</compile_context>

<pallas_src>
import jax
import jax.numpy as jnp
from jax.experimental import pallas as pl
from jax.experimental.pallas import tpu as pltpu


def _resblock_kernel(x_ref, w1_ref, w2_ref, s1_ref, b1_ref, s2_ref, b2_ref,
                     o_ref, xpad_ref, midpad_ref):
    # x_ref:      (1, H, W, C)   unpadded NHWC input tile (one batch element), f32
    # w1_ref:     (9*C, C)       conv1 weights, im2col-flattened (dy, dx, cin) x cout
    # w2_ref:     (9*C, C)       conv2 weights
    # s*_ref/b*_ref: (1, C)      folded BN scale / bias (f32)
    # o_ref:      (1, H, W, C)   output tile
    # xpad_ref:   (H+2, W+2, C)  VMEM scratch: SAME-padded input
    # midpad_ref: (H+2, W+2, C)  VMEM scratch: SAME-padded conv1->BN->ReLU output
    _, H, W, C = x_ref.shape
    Hp, Wp = H + 2, W + 2
    cdt = w1_ref.dtype  # compute dtype fed to the MXU (f32 or bf16)

    # --- zero only the 1-pixel border ring; the interior is overwritten below ---
    zrow = jnp.zeros((1, Wp, C), xpad_ref.dtype)
    zcol = jnp.zeros((Hp, 1, C), xpad_ref.dtype)
    for buf in (xpad_ref, midpad_ref):
        buf[0:1, :, :] = zrow
        buf[Hp - 1:Hp, :, :] = zrow
        buf[:, 0:1, :] = zcol
        buf[:, Wp - 1:Wp, :] = zcol

    x = x_ref[0]                                     # (H, W, C) f32
    # SAME padding done in-kernel: write the unpadded tile into the interior.
    xpad_ref[1:H + 1, 1:W + 1, :] = x

    def conv3x3(pad_ref, w_ref):
        p = pad_ref[...]                             # (H+2, W+2, C)
        # im2col: stack the 3 dx shifts along channels, then the 3 dy shifts.
        # Resulting channel order (dy, dx, cin) matches the host-side weight
        # reshape of HWIO (kh, kw, cin, cout) -> (9*cin, cout).
        xw = jnp.concatenate(
            [p[:, 0:W, :], p[:, 1:W + 1, :], p[:, 2:W + 2, :]], axis=-1)
        cols = jnp.concatenate(
            [xw[0:H, :, :], xw[1:H + 1, :, :], xw[2:H + 2, :, :]], axis=-1)
        cols = cols.reshape(H * W, 9 * C).astype(cdt)
        # Single MXU matmul with K = 9*C, f32 accumulation.
        return jnp.dot(cols, w_ref[...], preferred_element_type=jnp.float32)

    # conv1 -> BN1 -> ReLU, fused into the interior store of the padded scratch.
    acc1 = conv3x3(xpad_ref, w1_ref)                 # (H*W, C) f32
    out1 = jnp.maximum(acc1 * s1_ref[...] + b1_ref[...], 0.0)
    midpad_ref[1:H + 1, 1:W + 1, :] = out1.reshape(H, W, C)

    # conv2 -> BN2 -> +residual -> ReLU (residual read from the unpadded tile, f32).
    acc2 = conv3x3(midpad_ref, w2_ref)               # (H*W, C) f32
    out2 = acc2 * s2_ref[...] + b2_ref[...]
    out = jnp.maximum(out2 + x.reshape(H * W, C), 0.0)
    o_ref[...] = out.reshape(1, H, W, C).astype(o_ref.dtype)


def resblock_pallas(x_nhwc, w1_hwio, w2_hwio, s1, b1, s2, b2,
                    *, compute_dtype=jnp.float32):
    """x_nhwc: (N, H, W, C) float32.  Returns (N, H, W, C) float32."""
    N, H, W, C = x_nhwc.shape
    assert w1_hwio.shape == (3, 3, C, C), \
        "ResBlock with downsample=None requires inplanes == planes, stride == 1"
    assert w2_hwio.shape == (3, 3, C, C)

    # im2col-flattened weights: HWIO (kh, kw, cin, cout) -> (9*cin, cout).
    w1_flat = w1_hwio.reshape(9 * C, C).astype(compute_dtype)
    w2_flat = w2_hwio.reshape(9 * C, C).astype(compute_dtype)

    s1 = s1.reshape(1, C).astype(jnp.float32)
    b1 = b1.reshape(1, C).astype(jnp.float32)
    s2 = s2.reshape(1, C).astype(jnp.float32)
    b2 = b2.reshape(1, C).astype(jnp.float32)
    x_nhwc = x_nhwc.astype(jnp.float32)

    grid_spec = pltpu.PrefetchScalarGridSpec(
        num_scalar_prefetch=0,
        grid=(N,),
        in_specs=[
            pl.BlockSpec((1, H, W, C), lambda n: (n, 0, 0, 0)),   # unpadded x
            pl.BlockSpec((9 * C, C), lambda n: (0, 0)),           # w1 (constant)
            pl.BlockSpec((9 * C, C), lambda n: (0, 0)),           # w2 (constant)
            pl.BlockSpec((1, C), lambda n: (0, 0)),
            pl.BlockSpec((1, C), lambda n: (0, 0)),
            pl.BlockSpec((1, C), lambda n: (0, 0)),
            pl.BlockSpec((1, C), lambda n: (0, 0)),
        ],
        out_specs=pl.BlockSpec((1, H, W, C), lambda n: (n, 0, 0, 0)),
        scratch_shapes=[
            pltpu.VMEM((H + 2, W + 2, C), jnp.float32),   # padded input
            pltpu.VMEM((H + 2, W + 2, C), jnp.float32),   # padded conv1 output
        ],
    )

    return pl.pallas_call(
        _resblock_kernel,
        out_shape=jax.ShapeDtypeStruct((N, H, W, C), jnp.float32),
        grid_spec=grid_spec,
        compiler_params=pltpu.CompilerParams(
            dimension_semantics=("parallel",),
            vmem_limit_bytes=48 * 1024 * 1024),
    )(x_nhwc, w1_flat, w2_flat, s1, b1, s2, b2)


def resblock_ref(x_nhwc, w1_hwio, w2_hwio, s1, b1, s2, b2,
                 compute_dtype=jnp.float32):
    """Pure-JAX reference (lax.conv), same NHWC/HWIO layout and MXU dtype."""
    dn = ("NHWC", "HWIO", "NHWC")

    def conv(a, w):
        return jax.lax.conv_general_dilated(
            a.astype(compute_dtype), w.astype(compute_dtype), (1, 1), "SAME",
            dimension_numbers=dn, preferred_element_type=jnp.float32)

    out = conv(x_nhwc, w1_hwio)
    out = jnp.maximum(out * s1.reshape(1, 1, 1, -1) + b1.reshape(1, 1, 1, -1), 0.0)
    out = conv(out, w2_hwio)
    out = out * s2.reshape(1, 1, 1, -1) + b2.reshape(1, 1, 1, -1)
    return jnp.maximum(out + x_nhwc, 0.0)


def fold_bn(gamma, beta, mean, var, eps=1e-5):
    scale = gamma / jnp.sqrt(var + eps)
    bias = beta - mean * scale
    return scale, bias


if __name__ == "__main__":
    key = jax.random.PRNGKey(0)
    N, C, H, W = 2, 8, 16, 16  # inplanes == planes (downsample=None), stride=1
    keys = jax.random.split(key, 12)

    # Input in PyTorch NCHW convention, moved to the kernel's NHWC layout.
    x_nchw = jax.random.normal(keys[0], (N, C, H, W), jnp.float32)
    x_nhwc = jnp.transpose(x_nchw, (0, 2, 3, 1))

    # Conv weights in PyTorch (out, in, kh, kw), converted to HWIO.
    w1_oihw = jax.random.normal(keys[1], (C, C, 3, 3), jnp.float32) * 0.1
    w2_oihw = jax.random.normal(keys[2], (C, C, 3, 3), jnp.float32) * 0.1
    w1_hwio = jnp.transpose(w1_oihw, (2, 3, 1, 0))
    w2_hwio = jnp.transpose(w2_oihw, (2, 3, 1, 0))

    # Deterministic BatchNorm parameters (inference mode).
    g1 = 1.0 + 0.1 * jax.random.normal(keys[3], (C,), jnp.float32)
    be1 = 0.1 * jax.random.normal(keys[4], (C,), jnp.float32)
    m1 = 0.1 * jax.random.normal(keys[5], (C,), jnp.float32)
    v1 = 1.0 + 0.5 * jax.random.uniform(keys[6], (C,), jnp.float32)
    g2 = 1.0 + 0.1 * jax.random.normal(keys[7], (C,), jnp.float32)
    be2 = 0.1 * jax.random.normal(keys[8], (C,), jnp.float32)
    m2 = 0.1 * jax.random.normal(keys[9], (C,), jnp.float32)
    v2 = 1.0 + 0.5 * jax.random.uniform(keys[10], (C,), jnp.float32)

    s1, b1 = fold_bn(g1, be1, m1, v1)
    s2, b2 = fold_bn(g2, be2, m2, v2)

    # f32 MXU path: tight comparison against the lax.conv reference.
    out_f32 = jax.block_until_ready(
        resblock_pallas(x_nhwc, w1_hwio, w2_hwio, s1, b1, s2, b2,
                        compute_dtype=jnp.float32))
    ref_f32 = resblock_ref(x_nhwc, w1_hwio, w2_hwio, s1, b1, s2, b2)
    assert out_f32.shape == (N, H, W, C)
    assert jnp.allclose(out_f32, ref_f32, atol=1e-4, rtol=1e-4), (
        f"f32 max abs err = {jnp.max(jnp.abs(out_f32 - ref_f32))}")

    # bf16 MXU path (v6e/v7x fast path): compare against a bf16-matched reference.
    out_bf16 = jax.block_until_ready(
        resblock_pallas(x_nhwc, w1_hwio, w2_hwio, s1, b1, s2, b2,
                        compute_dtype=jnp.bfloat16))
    ref_bf16 = resblock_ref(x_nhwc, w1_hwio, w2_hwio, s1, b1, s2, b2,
                            compute_dtype=jnp.bfloat16)
    assert jnp.allclose(out_bf16, ref_bf16, atol=5e-2, rtol=5e-2), (
        f"bf16 max abs err = {jnp.max(jnp.abs(out_bf16 - ref_bf16))}")

    print("KERNEL_OK")
</pallas_src>

<mosaic_0001>
module attributes {stable_mosaic.version = 11 : i64} {
  func.func @_resblock_kernel(%arg0: i32, %arg1: memref<1x16x16x8xf32, #tpu.memory_space<vmem>>, %arg2: memref<72x8xf32, #tpu.memory_space<vmem>>, %arg3: memref<72x8xf32, #tpu.memory_space<vmem>>, %arg4: memref<1x8xf32, #tpu.memory_space<vmem>>, %arg5: memref<1x8xf32, #tpu.memory_space<vmem>>, %arg6: memref<1x8xf32, #tpu.memory_space<vmem>>, %arg7: memref<1x8xf32, #tpu.memory_space<vmem>>, %arg8: memref<1x16x16x8xf32, #tpu.memory_space<vmem>>, %arg9: memref<18x18x8xf32, #tpu.memory_space<vmem>>, %arg10: memref<18x18x8xf32, #tpu.memory_space<vmem>>) attributes {dimension_semantics = [#tpu.dimension_semantics<parallel>], iteration_bounds = array<i64: 2>, scalar_prefetch = 0 : i64, scratch_operands = 2 : i64, tpu.core_type = #tpu.core_type<tc>, window_params = [{transform_indices = @transform_0, window_bounds = array<i64: 1, 16, 16, 8>}, {pipeline_mode = #tpu.pipeline_mode<synchronous>, transform_indices = @transform_1, window_bounds = array<i64: 72, 8>}, {pipeline_mode = #tpu.pipeline_mode<synchronous>, transform_indices = @transform_2, window_bounds = array<i64: 72, 8>}, {pipeline_mode = #tpu.pipeline_mode<synchronous>, transform_indices = @transform_3, window_bounds = array<i64: 1, 8>}, {pipeline_mode = #tpu.pipeline_mode<synchronous>, transform_indices = @transform_4, window_bounds = array<i64: 1, 8>}, {pipeline_mode = #tpu.pipeline_mode<synchronous>, transform_indices = @transform_5, window_bounds = array<i64: 1, 8>}, {pipeline_mode = #tpu.pipeline_mode<synchronous>, transform_indices = @transform_6, window_bounds = array<i64: 1, 8>}, {transform_indices = @transform_7, window_bounds = array<i64: 1, 16, 16, 8>}]} {
    %cst = arith.constant 0.000000e+00 : f32
    %0 = vector.broadcast %cst : f32 to vector<1x18x8xf32>
    %cst_0 = arith.constant 0.000000e+00 : f32
    %1 = vector.broadcast %cst_0 : f32 to vector<18x1x8xf32>
    %c0 = arith.constant 0 : index
    %c0_1 = arith.constant 0 : index
    %c0_2 = arith.constant 0 : index
    %2 = vector.load %arg9[%c0, %c0_1, %c0_2] : memref<18x18x8xf32, #tpu.memory_space<vmem>>, vector<1x18x8xf32>
    tpu.vector_store %arg9[%c0, %c0_1, %c0_2], %0 {strides = array<i32>} : memref<18x18x8xf32, #tpu.memory_space<vmem>>, vector<1x18x8xf32>,
    %c17 = arith.constant 17 : index
    %c0_3 = arith.constant 0 : index
    %c0_4 = arith.constant 0 : index
    %3 = vector.load %arg9[%c17, %c0_3, %c0_4] : memref<18x18x8xf32, #tpu.memory_space<vmem>>, vector<1x18x8xf32>
    tpu.vector_store %arg9[%c17, %c0_3, %c0_4], %0 {strides = array<i32>} : memref<18x18x8xf32, #tpu.memory_space<vmem>>, vector<1x18x8xf32>,
    %c0_5 = arith.constant 0 : index
    %c0_6 = arith.constant 0 : index
    %c0_7 = arith.constant 0 : index
    %4 = vector.load %arg9[%c0_5, %c0_6, %c0_7] : memref<18x18x8xf32, #tpu.memory_space<vmem>>, vector<18x1x8xf32>
    tpu.vector_store %arg9[%c0_5, %c0_6, %c0_7], %1 {strides = array<i32>} : memref<18x18x8xf32, #tpu.memory_space<vmem>>, vector<18x1x8xf32>,
    %c0_8 = arith.constant 0 : index
    %c17_9 = arith.constant 17 : index
    %c0_10 = arith.constant 0 : index
    %5 = vector.load %arg9[%c0_8, %c17_9, %c0_10] : memref<18x18x8xf32, #tpu.memory_space<vmem>>, vector<18x1x8xf32>
    tpu.vector_store %arg9[%c0_8, %c17_9, %c0_10], %1 {strides = array<i32>} : memref<18x18x8xf32, #tpu.memory_space<vmem>>, vector<18x1x8xf32>,
    %c0_11 = arith.constant 0 : index
    %c0_12 = arith.constant 0 : index
    %c0_13 = arith.constant 0 : index
    %6 = vector.load %arg10[%c0_11, %c0_12, %c0_13] : memref<18x18x8xf32, #tpu.memory_space<vmem>>, vector<1x18x8xf32>
    tpu.vector_store %arg10[%c0_11, %c0_12, %c0_13], %0 {strides = array<i32>} : memref<18x18x8xf32, #tpu.memory_space<vmem>>, vector<1x18x8xf32>,
    %c17_14 = arith.constant 17 : index
    %c0_15 = arith.constant 0 : index
    %c0_16 = arith.constant 0 : index
    %7 = vector.load %arg10[%c17_14, %c0_15, %c0_16] : memref<18x18x8xf32, #tpu.memory_space<vmem>>, vector<1x18x8xf32>
    tpu.vector_store %arg10[%c17_14, %c0_15, %c0_16], %0 {strides = array<i32>} : memref<18x18x8xf32, #tpu.memory_space<vmem>>, vector<1x18x8xf32>,
    %c0_17 = arith.constant 0 : index
    %c0_18 = arith.constant 0 : index
    %c0_19 = arith.constant 0 : index
    %8 = vector.load %arg10[%c0_17, %c0_18, %c0_19] : memref<18x18x8xf32, #tpu.memory_space<vmem>>, vector<18x1x8xf32>
    tpu.vector_store %arg10[%c0_17, %c0_18, %c0_19], %1 {strides = array<i32>} : memref<18x18x8xf32, #tpu.memory_space<vmem>>, vector<18x1x8xf32>,
    %c0_20 = arith.constant 0 : index
    %c17_21 = arith.constant 17 : index
    %c0_22 = arith.constant 0 : index
    %9 = vector.load %arg10[%c0_20, %c17_21, %c0_22] : memref<18x18x8xf32, #tpu.memory_space<vmem>>, vector<18x1x8xf32>
    tpu.vector_store %arg10[%c0_20, %c17_21, %c0_22], %1 {strides = array<i32>} : memref<18x18x8xf32, #tpu.memory_space<vmem>>, vector<18x1x8xf32>,
    %c0_23 = arith.constant 0 : index
    %c0_24 = arith.constant 0 : index
    %c0_25 = arith.constant 0 : index
    %c0_26 = arith.constant 0 : index
    %10 = vector.load %arg1[%c0_23, %c0_24, %c0_25, %c0_26] : memref<1x16x16x8xf32, #tpu.memory_space<vmem>>, vector<1x16x16x8xf32>
    %11 = vector.shape_cast %10 : vector<1x16x16x8xf32> to vector<16x16x8xf32>
    %c1 = arith.constant 1 : index
    %c1_27 = arith.constant 1 : index
    %c0_28 = arith.constant 0 : index
    %12 = vector.load %arg9[%c1, %c1_27, %c0_28] : memref<18x18x8xf32, #tpu.memory_space<vmem>>, vector<16x16x8xf32>
    tpu.vector_store %arg9[%c1, %c1_27, %c0_28], %11 {strides = array<i32>} : memref<18x18x8xf32, #tpu.memory_space<vmem>>, vector<16x16x8xf32>,
    %c0_29 = arith.constant 0 : index
    %c0_30 = arith.constant 0 : index
    %c0_31 = arith.constant 0 : index
    %13 = vector.load %arg9[%c0_29, %c0_30, %c0_31] : memref<18x18x8xf32, #tpu.memory_space<vmem>>, vector<18x18x8xf32>
    %14 = vector.extract_strided_slice %13 {offsets = [0, 0, 0], sizes = [18, 16, 8], strides = [1, 1, 1]} : vector<18x18x8xf32> to vector<18x16x8xf32>
    %15 = vector.extract_strided_slice %13 {offsets = [0, 1, 0], sizes = [18, 16, 8], strides = [1, 1, 1]} : vector<18x18x8xf32> to vector<18x16x8xf32>
    %16 = vector.extract_strided_slice %13 {offsets = [0, 2, 0], sizes = [18, 16, 8], strides = [1, 1, 1]} : vector<18x18x8xf32> to vector<18x16x8xf32>
    %17 = tpu.concatenate %14, %15, %16 in 2 : vector<18x16x8xf32>, vector<18x16x8xf32>, vector<18x16x8xf32> -> vector<18x16x24xf32>
    %18 = vector.extract_strided_slice %17 {offsets = [0, 0, 0], sizes = [16, 16, 24], strides = [1, 1, 1]} : vector<18x16x24xf32> to vector<16x16x24xf32>
    %19 = vector.extract_strided_slice %17 {offsets = [1, 0, 0], sizes = [16, 16, 24], strides = [1, 1, 1]} : vector<18x16x24xf32> to vector<16x16x24xf32>
    %20 = vector.extract_strided_slice %17 {offsets = [2, 0, 0], sizes = [16, 16, 24], strides = [1, 1, 1]} : vector<18x16x24xf32> to vector<16x16x24xf32>
    %21 = tpu.concatenate %18, %19, %20 in 2 : vector<16x16x24xf32>, vector<16x16x24xf32>, vector<16x16x24xf32> -> vector<16x16x72xf32>
    %22 = vector.shape_cast %21 : vector<16x16x72xf32> to vector<256x72xf32>
    %c0_32 = arith.constant 0 : index
    %c0_33 = arith.constant 0 : index
    %23 = vector.load %arg2[%c0_32, %c0_33] : memref<72x8xf32, #tpu.memory_space<vmem>>, vector<72x8xf32>
    %cst_34 = arith.constant dense<0.000000e+00> : vector<256x8xf32>
    %24 = tpu.matmul %22, %23, %cst_34 {dimension_numbers = #tpu.dot_dimension_numbers<[1], [0], [0], [1], [0, 0, 1, 1], [], []>} : vector<256x72xf32>, vector<72x8xf32>, vector<256x8xf32> -> vector<256x8xf32>
    %c0_35 = arith.constant 0 : index
    %c0_36 = arith.constant 0 : index
    %25 = vector.load %arg4[%c0_35, %c0_36] : memref<1x8xf32, #tpu.memory_space<vmem>>, vector<1x8xf32>
    %26 = vector.broadcast %25 : vector<1x8xf32> to vector<256x8xf32>
    %27 = arith.mulf %24, %26 : vector<256x8xf32>
    %c0_37 = arith.constant 0 : index
    %c0_38 = arith.constant 0 : index
    %28 = vector.load %arg5[%c0_37, %c0_38] : memref<1x8xf32, #tpu.memory_space<vmem>>, vector<1x8xf32>
    %29 = vector.broadcast %28 : vector<1x8xf32> to vector<256x8xf32>
    %30 = arith.addf %27, %29 : vector<256x8xf32>
    %cst_39 = arith.constant 0.000000e+00 : f32
    %31 = vector.broadcast %cst_39 : f32 to vector<256x8xf32>
    %32 = arith.maximumf %30, %31 : vector<256x8xf32>
    %33 = vector.shape_cast %32 : vector<256x8xf32> to vector<16x16x8xf32>
    %c1_40 = arith.constant 1 : index
    %c1_41 = arith.constant 1 : index
    %c0_42 = arith.constant 0 : index
    %34 = vector.load %arg10[%c1_40, %c1_41, %c0_42] : memref<18x18x8xf32, #tpu.memory_space<vmem>>, vector<16x16x8xf32>
    tpu.vector_store %arg10[%c1_40, %c1_41, %c0_42], %33 {strides = array<i32>} : memref<18x18x8xf32, #tpu.memory_space<vmem>>, vector<16x16x8xf32>,
    %c0_43 = arith.constant 0 : index
    %c0_44 = arith.constant 0 : index
    %c0_45 = arith.constant 0 : index
    %35 = vector.load %arg10[%c0_43, %c0_44, %c0_45] : memref<18x18x8xf32, #tpu.memory_space<vmem>>, vector<18x18x8xf32>
    %36 = vector.extract_strided_slice %35 {offsets = [0, 0, 0], sizes = [18, 16, 8], strides = [1, 1, 1]} : vector<18x18x8xf32> to vector<18x16x8xf32>
    %37 = vector.extract_strided_slice %35 {offsets = [0, 1, 0], sizes = [18, 16, 8], strides = [1, 1, 1]} : vector<18x18x8xf32> to vector<18x16x8xf32>
    %38 = vector.extract_strided_slice %35 {offsets = [0, 2, 0], sizes = [18, 16, 8], strides = [1, 1, 1]} : vector<18x18x8xf32> to vector<18x16x8xf32>
    %39 = tpu.concatenate %36, %37, %38 in 2 : vector<18x16x8xf32>, vector<18x16x8xf32>, vector<18x16x8xf32> -> vector<18x16x24xf32>
    %40 = vector.extract_strided_slice %39 {offsets = [0, 0, 0], sizes = [16, 16, 24], strides = [1, 1, 1]} : vector<18x16x24xf32> to vector<16x16x24xf32>
    %41 = vector.extract_strided_slice %39 {offsets = [1, 0, 0], sizes = [16, 16, 24], strides = [1, 1, 1]} : vector<18x16x24xf32> to vector<16x16x24xf32>
    %42 = vector.extract_strided_slice %39 {offsets = [2, 0, 0], sizes = [16, 16, 24], strides = [1, 1, 1]} : vector<18x16x24xf32> to vector<16x16x24xf32>
    %43 = tpu.concatenate %40, %41, %42 in 2 : vector<16x16x24xf32>, vector<16x16x24xf32>, vector<16x16x24xf32> -> vector<16x16x72xf32>
    %44 = vector.shape_cast %43 : vector<16x16x72xf32> to vector<256x72xf32>
    %c0_46 = arith.constant 0 : index
    %c0_47 = arith.constant 0 : index
    %45 = vector.load %arg3[%c0_46, %c0_47] : memref<72x8xf32, #tpu.memory_space<vmem>>, vector<72x8xf32>
    %cst_48 = arith.constant dense<0.000000e+00> : vector<256x8xf32>
    %46 = tpu.matmul %44, %45, %cst_48 {dimension_numbers = #tpu.dot_dimension_numbers<[1], [0], [0], [1], [0, 0, 1, 1], [], []>} : vector<256x72xf32>, vector<72x8xf32>, vector<256x8xf32> -> vector<256x8xf32>
    %c0_49 = arith.constant 0 : index
    %c0_50 = arith.constant 0 : index
    %47 = vector.load %arg6[%c0_49, %c0_50] : memref<1x8xf32, #tpu.memory_space<vmem>>, vector<1x8xf32>
    %48 = vector.broadcast %47 : vector<1x8xf32> to vector<256x8xf32>
    %49 = arith.mulf %46, %48 : vector<256x8xf32>
    %c0_51 = arith.constant 0 : index
    %c0_52 = arith.constant 0 : index
    %50 = vector.load %arg7[%c0_51, %c0_52] : memref<1x8xf32, #tpu.memory_space<vmem>>, vector<1x8xf32>
    %51 = vector.broadcast %50 : vector<1x8xf32> to vector<256x8xf32>
    %52 = arith.addf %49, %51 : vector<256x8xf32>
    %53 = vector.shape_cast %11 : vector<16x16x8xf32> to vector<256x8xf32>
    %54 = arith.addf %52, %53 : vector<256x8xf32>
    %cst_53 = arith.constant 0.000000e+00 : f32
    %55 = vector.broadcast %cst_53 : f32 to vector<256x8xf32>
    %56 = arith.maximumf %54, %55 : vector<256x8xf32>
    %57 = vector.shape_cast %56 : vector<256x8xf32> to vector<1x16x16x8xf32>
    %c0_54 = arith.constant 0 : index
    %c0_55 = arith.constant 0 : index
    %c0_56 = arith.constant 0 : index
    %c0_57 = arith.constant 0 : index
    %58 = vector.load %arg8[%c0_54, %c0_55, %c0_56, %c0_57] : memref<1x16x16x8xf32, #tpu.memory_space<vmem>>, vector<1x16x16x8xf32>
    tpu.vector_store %arg8[%c0_54, %c0_55, %c0_56, %c0_57], %57 {strides = array<i32>} : memref<1x16x16x8xf32, #tpu.memory_space<vmem>>, vector<1x16x16x8xf32>,
    return
  }
  func.func @transform_0(%arg0: i32) -> (i32, i32, i32, i32) {
    %c0_i32 = arith.constant 0 : i32
    %c0_i32_0 = arith.constant 0 : i32
    %c0_i32_1 = arith.constant 0 : i32
    %c0_i32_2 = arith.constant 0 : i32
    return %arg0, %c0_i32, %c0_i32_0, %c0_i32_1 : i32, i32, i32, i32
  }
  func.func @transform_1(%arg0: i32) -> (i32, i32) {
    %c0_i32 = arith.constant 0 : i32
    %c0_i32_0 = arith.constant 0 : i32
    %c0_i32_1 = arith.constant 0 : i32
    return %c0_i32, %c0_i32_0 : i32, i32
  }
  func.func @transform_2(%arg0: i32) -> (i32, i32) {
    %c0_i32 = arith.constant 0 : i32
    %c0_i32_0 = arith.constant 0 : i32
    %c0_i32_1 = arith.constant 0 : i32
    return %c0_i32, %c0_i32_0 : i32, i32
  }
  func.func @transform_3(%arg0: i32) -> (i32, i32) {
    %c0_i32 = arith.constant 0 : i32
    %c0_i32_0 = arith.constant 0 : i32
    %c0_i32_1 = arith.constant 0 : i32
    return %c0_i32, %c0_i32_0 : i32, i32
  }
  func.func @transform_4(%arg0: i32) -> (i32, i32) {
    %c0_i32 = arith.constant 0 : i32
    %c0_i32_0 = arith.constant 0 : i32
    %c0_i32_1 = arith.constant 0 : i32
    return %c0_i32, %c0_i32_0 : i32, i32
  }
  func.func @transform_5(%arg0: i32) -> (i32, i32) {
    %c0_i32 = arith.constant 0 : i32
    %c0_i32_0 = arith.constant 0 : i32
    %c0_i32_1 = arith.constant 0 : i32
    return %c0_i32, %c0_i32_0 : i32, i32
  }
  func.func @transform_6(%arg0: i32) -> (i32, i32) {
    %c0_i32 = arith.constant 0 : i32
    %c0_i32_0 = arith.constant 0 : i32
    %c0_i32_1 = arith.constant 0 : i32
    return %c0_i32, %c0_i32_0 : i32, i32
  }
  func.func @transform_7(%arg0: i32) -> (i32, i32, i32, i32) {
    %c0_i32 = arith.constant 0 : i32
    %c0_i32_0 = arith.constant 0 : i32
    %c0_i32_1 = arith.constant 0 : i32
    %c0_i32_2 = arith.constant 0 : i32
    return %arg0, %c0_i32, %c0_i32_0, %c0_i32_1 : i32, i32, i32, i32
  }
}

</mosaic_0001>

<llo_original>
// kernel: tpu_custom_call.1
$region0: #{tpu_custom_call.1}
  #allocation0 [shape = 'u32[]', space=smem, size = 0x4, offset = 0x4, fixed_abs, tag = 'smem constant byte address 0x4 - core index']
  #allocation1 [shape = 'u32[144,128]{1,0:T(1,128)}', space=vmem, size = 0x12000, scoped, tag = 'internal scratch']
  #allocation2 [shape = 'f32[18,18,8]{2,1,0:T(8,128)}', space=vmem, size = 0x36000, scoped, tag = 'scratch operand']
  #allocation3 [shape = 'f32[18,18,8]{2,1,0:T(8,128)}', space=vmem, size = 0x36000, scoped, tag = 'scratch operand']
  %s0 = inlined_call_operand.vmem [shape: f32[2,16,16,8], index: 0, kind: input, shape index: {}]
  %s1 = inlined_call_operand.vmem [shape: f32[72,8], index: 1, kind: input, shape index: {}]
  %s2 = inlined_call_operand.vmem [shape: f32[72,8], index: 2, kind: input, shape index: {}]
  %s3 = inlined_call_operand.vmem [shape: f32[1,8], index: 3, kind: input, shape index: {}]
  %s4 = inlined_call_operand.vmem [shape: f32[1,8], index: 4, kind: input, shape index: {}]
  %s5 = inlined_call_operand.vmem [shape: f32[1,8], index: 5, kind: input, shape index: {}]
  %s6 = inlined_call_operand.vmem [shape: f32[1,8], index: 6, kind: input, shape index: {}]
  %s7 = inlined_call_operand.vmem [shape: f32[2,16,16,8], index: 7, kind: output, shape index: {}]
  %s8 = sld [smem:[#allocation0]]
  $region61: #{tpu_custom_call.1} parent=0
    _
  %s10 = ssub.s32 1, %s8
  %s11 = scalar_select 0, %s10, %s8
  loop: start=0, step=1, limit=4
  $region2: #{tpu_custom_call.1} parent=0 // loop_pre_header
    _
  $region3: #{tpu_custom_call.1} parent=0 // loop_header
    %s13 = sphi 0, %s17
    %p14 = scmp.ge.s32.totalorder %s13, 4
    %s23 = sphi 0, %s25
    %s26 = sphi 0, %s23
    %s27 = sphi 0, %s26
    %s43 = sphi 0, %s27
    %s47 = sphi 0, %s47
    %s49 = sphi 0, %s47
    %s50 = sphi 0, %s49
    %s64 = sphi 0, %s50
    %s68 = sphi 0, %s68
    %s70 = sphi 0, %s68
    %s71 = sphi 0, %s70
    %s85 = sphi 0, %s71
    %s89 = sphi 0, %s89
    %s91 = sphi 0, %s89
    %s92 = sphi 0, %s91
    %s106 = sphi 0, %s92
    %s110 = sphi 0, %s110
    %s112 = sphi 0, %s110
    %s113 = sphi 0, %s112
    %s127 = sphi 0, %s113
    %s131 = sphi 0, %s131
    %s133 = sphi 0, %s131
    %s134 = sphi 0, %s133
    %s148 = sphi 0, %s134
    %s152 = sphi 0, %s152
    %s154 = sphi 0, %s152
    %s155 = sphi 0, %s154
    %s169 = sphi 0, %s155
    %s175 = sphi 0, %s177
    %s178 = sphi 0, %s175
    %s179 = sphi 0, %s178
    %s195 = sphi 0, %s179
  $region4: #{tpu_custom_call.1} parent=0 // loop_header_branch
    %16 = sbr.rel (%p14) target = $region8
  $region5: #{tpu_custom_call.1} parent=0 // loop_body
    %s18 = ssub.s32 %s13, 1
    %s19 = ssub.s32 %s13, 2
    %s20 = sadd.s32 %s13, 1
    %s21 = ssub.s32 %s13, %s20
    %p22 = scmp.eq.s32.totalorder %s21, 0
    %s24 = sadd.s32 %s23, 1
    %s25 = scalar_select %p22, %s23, %s24
    %p28 = pneg %p22
    %p29 = scmp.eq.s32.totalorder %s13, 1
    %p30 = por %p28, %p29
    %p31 = scmp.ne.s32.totalorder %s23, %s26
    %p32 = scmp.eq.s32.totalorder %s13, 0
    %p33 = por %p31, %p32
    %p34 = scmp.ne.s32.totalorder %s23, %s26
    %p35 = scmp.eq.s32.totalorder %s18, 1
    %p36 = por %p34, %p35
    %p37 = scmp.ne.s32.totalorder %s26, %s27
    %p38 = scmp.eq.s32.totalorder %s18, 0
    %p39 = por %p37, %p38
    %p40 = scmp.ne.s32.totalorder %s26, %s27
    %p41 = scmp.eq.s32.totalorder %s19, 1
    %p42 = por %p40, %p41
    %p44 = scmp.ne.s32.totalorder %s27, %s43
    %p45 = scmp.eq.s32.totalorder %s19, 0
    %p46 = por %p44, %p45
    %s48 = sadd.s32 %s47, 1
    %p51 = scmp.eq.s32.totalorder %s13, 1
    %p52 = scmp.ne.s32.totalorder %s47, %s49
    %p53 = scmp.eq.s32.totalorder %s13, 0
    %p54 = por %p52, %p53
    %p55 = scmp.ne.s32.totalorder %s47, %s49
    %p56 = scmp.eq.s32.totalorder %s18, 1
    %p57 = por %p55, %p56
    %p58 = scmp.ne.s32.totalorder %s49, %s50
    %p59 = scmp.eq.s32.totalorder %s18, 0
    %p60 = por %p58, %p59
    %p61 = scmp.ne.s32.totalorder %s49, %s50
    %p62 = scmp.eq.s32.totalorder %s19, 1
    %p63 = por %p61, %p62
    %p65 = scmp.ne.s32.totalorder %s50, %s64
    %p66 = scmp.eq.s32.totalorder %s19, 0
    %p67 = por %p65, %p66
    %s69 = sadd.s32 %s68, 1
    %p72 = scmp.eq.s32.totalorder %s13, 1
    %p73 = scmp.ne.s32.totalorder %s68, %s70
    %p74 = scmp.eq.s32.totalorder %s13, 0
    %p75 = por %p73, %p74
    %p76 = scmp.ne.s32.totalorder %s68, %s70
    %p77 = scmp.eq.s32.totalorder %s18, 1
    %p78 = por %p76, %p77
    %p79 = scmp.ne.s32.totalorder %s70, %s71
    %p80 = scmp.eq.s32.totalorder %s18, 0
    %p81 = por %p79, %p80
    %p82 = scmp.ne.s32.totalorder %s70, %s71
    %p83 = scmp.eq.s32.totalorder %s19, 1
    %p84 = por %p82, %p83
    %p86 = scmp.ne.s32.totalorder %s71, %s85
    %p87 = scmp.eq.s32.totalorder %s19, 0
    %p88 = por %p86, %p87
    %s90 = sadd.s32 %s89, 1
    %p93 = scmp.eq.s32.totalorder %s13, 1
    %p94 = scmp.ne.s32.totalorder %s89, %s91
    %p95 = scmp.eq.s32.totalorder %s13, 0
    %p96 = por %p94, %p95
    %p97 = scmp.ne.s32.totalorder %s89, %s91
    %p98 = scmp.eq.s32.totalorder %s18, 1
    %p99 = por %p97, %p98
    %p100 = scmp.ne.s32.totalorder %s91, %s92
    %p101 = scmp.eq.s32.totalorder %s18, 0
    %p102 = por %p100, %p101
    %p103 = scmp.ne.s32.totalorder %s91, %s92
    %p104 = scmp.eq.s32.totalorder %s19, 1
    %p105 = por %p103, %p104
    %p107 = scmp.ne.s32.totalorder %s92, %s106
    %p108 = scmp.eq.s32.totalorder %s19, 0
    %p109 = por %p107, %p108
    %s111 = sadd.s32 %s110, 1
    %p114 = scmp.eq.s32.totalorder %s13, 1
    %p115 = scmp.ne.s32.totalorder %s110, %s112
    %p116 = scmp.eq.s32.totalorder %s13, 0
    %p117 = por %p115, %p116
    %p118 = scmp.ne.s32.totalorder %s110, %s112
    %p119 = scmp.eq.s32.totalorder %s18, 1
    %p120 = por %p118, %p119
    %p121 = scmp.ne.s32.totalorder %s112, %s113
    %p122 = scmp.eq.s32.totalorder %s18, 0
    %p123 = por %p121, %p122
    %p124 = scmp.ne.s32.totalorder %s112, %s113
    %p125 = scmp.eq.s32.totalorder %s19, 1
    %p126 = por %p124, %p125
    %p128 = scmp.ne.s32.totalorder %s113, %s127
    %p129 = scmp.eq.s32.totalorder %s19, 0
    %p130 = por %p128, %p129
    %s132 = sadd.s32 %s131, 1
    %p135 = scmp.eq.s32.totalorder %s13, 1
    %p136 = scmp.ne.s32.totalorder %s131, %s133
    %p137 = scmp.eq.s32.totalorder %s13, 0
    %p138 = por %p136, %p137
    %p139 = scmp.ne.s32.totalorder %s131, %s133
    %p140 = scmp.eq.s32.totalorder %s18, 1
    %p141 = por %p139, %p140
    %p142 = scmp.ne.s32.totalorder %s133, %s134
    %p143 = scmp.eq.s32.totalorder %s18, 0
    %p144 = por %p142, %p143
    %p145 = scmp.ne.s32.totalorder %s133, %s134
    %p146 = scmp.eq.s32.totalorder %s19, 1
    %p147 = por %p145, %p146
    %p149 = scmp.ne.s32.totalorder %s134, %s148
    %p150 = scmp.eq.s32.totalorder %s19, 0
    %p151 = por %p149, %p150
    %s153 = sadd.s32 %s152, 1
    %p156 = scmp.eq.s32.totalorder %s13, 1
    %p157 = scmp.ne.s32.totalorder %s152, %s154
    %p158 = scmp.eq.s32.totalorder %s13, 0
    %p159 = por %p157, %p158
    %p160 = scmp.ne.s32.totalorder %s152, %s154
    %p161 = scmp.eq.s32.totalorder %s18, 1
    %p162 = por %p160, %p161
    %p163 = scmp.ne.s32.totalorder %s154, %s155
    %p164 = scmp.eq.s32.totalorder %s18, 0
    %p165 = por %p163, %p164
    %p166 = scmp.ne.s32.totalorder %s154, %s155
    %p167 = scmp.eq.s32.totalorder %s19, 1
    %p168 = por %p166, %p167
    %p170 = scmp.ne.s32.totalorder %s155, %s169
    %p171 = scmp.eq.s32.totalorder %s19, 0
    %p172 = por %p170, %p171
    %s173 = ssub.s32 %s13, %s20
    %p174 = scmp.eq.s32.totalorder %s173, 0
    %s176 = sadd.s32 %s175, 1
    %s177 = scalar_select %p174, %s175, %s176
    %p180 = pneg %p174
    %p181 = scmp.eq.s32.totalorder %s13, 1
    %p182 = por %p180, %p181
    %p183 = scmp.ne.s32.totalorder %s175, %s178
    %p184 = scmp.eq.s32.totalorder %s13, 0
    %p185 = por %p183, %p184
    %p186 = scmp.ne.s32.totalorder %s175, %s178
    %p187 = scmp.eq.s32.totalorder %s18, 1
    %p188 = por %p186, %p187
    %p189 = scmp.ne.s32.totalorder %s178, %s179
    %p190 = scmp.eq.s32.totalorder %s18, 0
    %p191 = por %p189, %p190
    %p192 = scmp.ne.s32.totalorder %s178, %s179
    %p193 = scmp.eq.s32.totalorder %s19, 1
    %p194 = por %p192, %p193
    %p196 = scmp.ne.s32.totalorder %s179, %s195
    %p197 = scmp.eq.s32.totalorder %s19, 0
    %p198 = por %p196, %p197
    %p199 = scmp.le.s32.totalorder 1, %s13
    %p200 = scmp.lt.s32.totalorder %s13, 3
    %p201 = pnand %p199, %p200
    %p202 = pneg %p201
    // Predicated region
    $region9: #{tpu_custom_call.1} parent=5 // pred_check
      _
    $region10: #{tpu_custom_call.1} parent=5 // pred_check_branch
      %204 = sbr.rel (%p201) target = $region12
    $region11: #{tpu_custom_call.1} parent=5 // pred_region
      %s205 = ssub.s32 %s13, 1
      // Predicated region
      $region13: #{tpu_custom_call.1} parent=11 // pred_check
        %p206 = pneg %p60
      $region14: #{tpu_custom_call.1} parent=11 // pred_check_branch
        %208 = sbr.rel (%p206) target = $region16
      $region15: #{tpu_custom_call.1} parent=11 // pred_region
        _
      $region16: #{tpu_custom_call.1} parent=11 // pred_fallthru
        _
      // Predicated region
      $region17: #{tpu_custom_call.1} parent=11 // pred_check
        %p209 = pneg %p81
      $region18: #{tpu_custom_call.1} parent=11 // pred_check_branch
        %211 = sbr.rel (%p209) target = $region20
      $region19: #{tpu_custom_call.1} parent=11 // pred_region
        _
      $region20: #{tpu_custom_call.1} parent=11 // pred_fallthru
        _
      // Predicated region
      $region21: #{tpu_custom_call.1} parent=11 // pred_check
        %p212 = pneg %p102
      $region22: #{tpu_custom_call.1} parent=11 // pred_check_branch
        %214 = sbr.rel (%p212) target = $region24
      $region23: #{tpu_custom_call.1} parent=11 // pred_region
        _
      $region24: #{tpu_custom_call.1} parent=11 // pred_fallthru
        _
      // Predicated region
      $region25: #{tpu_custom_call.1} parent=11 // pred_check
        %p215 = pneg %p123
      $region26: #{tpu_custom_call.1} parent=11 // pred_check_branch
        %217 = sbr.rel (%p215) target = $region28
      $region27: #{tpu_custom_call.1} parent=11 // pred_region
        _
      $region28: #{tpu_custom_call.1} parent=11 // pred_fallthru
        _
      // Predicated region
      $region29: #{tpu_custom_call.1} parent=11 // pred_check
        %p218 = pneg %p144
      $region30: #{tpu_custom_call.1} parent=11 // pred_check_branch
        %220 = sbr.rel (%p218) target = $region32
      $region31: #{tpu_custom_call.1} parent=11 // pred_region
        _
      $region32: #{tpu_custom_call.1} parent=11 // pred_fallthru
        _
      // Predicated region
      $region33: #{tpu_custom_call.1} parent=11 // pred_check
        %p221 = pneg %p165
      $region34: #{tpu_custom_call.1} parent=11 // pred_check_branch
        %223 = sbr.rel (%p221) target = $region36
      $region35: #{tpu_custom_call.1} parent=11 // pred_region
        _
      $region36: #{tpu_custom_call.1} parent=11 // pred_fallthru
        _
    $region12: #{tpu_custom_call.1} parent=5 // pred_fallthru
      _
    %p224 = scmp.lt.s32.totalorder %s13, 2
    // Predicated region
    $region37: #{tpu_custom_call.1} parent=5 // pred_check
      %p225 = pneg %p224
    $region38: #{tpu_custom_call.1} parent=5 // pred_check_branch
      %227 = sbr.rel (%p225) target = $region40
    $region39: #{tpu_custom_call.1} parent=5 // pred_region
      // Predicated region
      $region41: #{tpu_custom_call.1} parent=39 // pred_check
        %p228 = pneg %p33
      $region42: #{tpu_custom_call.1} parent=39 // pred_check_branch
        %230 = sbr.rel (%p228) target = $region44
      $region43: #{tpu_custom_call.1} parent=39 // pred_region
        %p231 = scmp.lt.s32.totalorder %s13, 1
        %s232 = scalar_select %p231, %s13, 1
        %s233 = smul.addr %s232, 32
        %s234 = smul.addr %s233, 8
        %s235 = scalar_lea.vmem %s0, %s234
      $region44: #{tpu_custom_call.1} parent=39 // pred_fallthru
        _
    $region40: #{tpu_custom_call.1} parent=5 // pred_fallthru
      _
    %p236 = scmp.le.s32.totalorder 1, %s13
    %p237 = scmp.lt.s32.totalorder %s13, 3
    %p238 = pnand %p236, %p237
    %p239 = pneg %p238
    // Predicated region
    $region45: #{tpu_custom_call.1} parent=5 // pred_check
      _
    $region46: #{tpu_custom_call.1} parent=5 // pred_check_branch
      %241 = sbr.rel (%p238) target = $region48
    $region47: #{tpu_custom_call.1} parent=5 // pred_region
      %s242 = ssub.s32 %s13, 1
      %p243 = scmp.lt.s32.totalorder %s18, 1
      %s244 = scalar_select %p243, %s18, 1
      %s245 = smul.addr %s244, 32
      %s246 = smul.addr %s245, 8
      %s247 = scalar_lea.vmem %s0, %s246
      %p248 = pneg %p39
      %p249 = pneg %p36
      %p250 = pneg %p60
      %p251 = pneg %p57
      %p252 = pneg %p81
      %p253 = pneg %p78
      %p254 = pneg %p102
      %p255 = pneg %p99
      %p256 = pneg %p123
      %p257 = pneg %p120
      %p258 = pneg %p144
      %p259 = pneg %p141
      %p260 = pneg %p165
      %p261 = pneg %p162
      %p262 = pneg %p191
      %p263 = pneg %p188
      %p264 = scmp.lt.s32.totalorder %s18, 1
      %s265 = scalar_select %p264, %s18, 1
      %s266 = smul.addr %s265, 32
      %s267 = smul.addr %s266, 8
      %s268 = scalar_lea.vmem %s7, %s267
      %p269 = scmp.lt.s32.totalorder %s18, 1
      %s270 = scalar_select %p269, %s18, 1
      %s271 = smul.addr %s270, 32
      %s272 = smul.addr %s271, 8
      %s273 = scalar_lea.vmem %s0, %s272
      %p274 = scmp.lt.s32.totalorder %s18, 1
      %s275 = scalar_select %p274, %s18, 1
      %s276 = smul.addr %s275, 32
      %s277 = smul.addr %s276, 8
      %s278 = scalar_lea.vmem %s7, %s277
      %vm279 = vcmask 64512
      %280 = vst.msk [vmem:[#allocation2] sm:$0xff] %vm279, 0.0
      %281 = vst.msk [vmem:[#allocation2 + $0x8] sm:$0xff] %vm279, 0.0
      %vm282 = vcmask 58368
      %283 = vst.msk [vmem:[#allocation2 + $0x10] sm:$0x3] %vm282, 0.0
      %s284 = scalar_lea.vmem [#allocation2], 408
      %285 = vst.msk [vmem:[%s284] sm:$0xff] %vm279, 0.0
      %286 = vst.msk [vmem:[%s284 + $0x8] sm:$0xff] %vm279, 0.0
      %287 = vst.msk [vmem:[%s284 + $0x10] sm:$0x3] %vm282, 0.0
      %vm288 = vcmask 57344
      %289 = vst.msk [vmem:[#allocation2] sm:$0x1] %vm288, 0.0
      %290 = vst.msk [vmem:[#allocation2 + $0x18] sm:$0x1] %vm288, 0.0
      %291 = vst.msk [vmem:[#allocation2 + $0x30] sm:$0x1] %vm288, 0.0
      %292 = vst.msk [vmem:[#allocation2 + $0x48] sm:$0x1] %vm288, 0.0
      %293 = vst.msk [vmem:[#allocation2 + $0x60] sm:$0x1] %vm288, 0.0
      %294 = vst.msk [vmem:[#allocation2 + $0x78] sm:$0x1] %vm288, 0.0
      %295 = vst.msk [vmem:[#allocation2 + $0x90] sm:$0x1] %vm288, 0.0
      %296 = vst.msk [vmem:[#allocation2 + $0xa8] sm:$0x1] %vm288, 0.0
      %297 = vst.msk [vmem:[#allocation2 + $0xc0] sm:$0x1] %vm288, 0.0
      %298 = vst.msk [vmem:[#allocation2 + $0xd8] sm:$0x1] %vm288, 0.0
      %299 = vst.msk [vmem:[#allocation2 + $0xf0] sm:$0x1] %vm288, 0.0
      %300 = vst.msk [vmem:[#allocation2 + $0x108] sm:$0x1] %vm288, 0.0
      %301 = vst.msk [vmem:[#allocation2 + $0x120] sm:$0x1] %vm288, 0.0
      %302 = vst.msk [vmem:[#allocation2 + $0x138] sm:$0x1] %vm288, 0.0
      %303 = vst.msk [vmem:[#allocation2 + $0x150] sm:$0x1] %vm288, 0.0
      %304 = vst.msk [vmem:[#allocation2 + $0x168] sm:$0x1] %vm288, 0.0
      %305 = vst.msk [vmem:[#allocation2 + $0x180] sm:$0x1] %vm288, 0.0
      %306 = vst.msk [vmem:[#allocation2 + $0x198] sm:$0x1] %vm288, 0.0
      %307 = vst.msk [vmem:[#allocation2 + $0x11] sm:$0x1] %vm288, 0.0
      %308 = vst.msk [vmem:[#allocation2 + $0x29] sm:$0x1] %vm288, 0.0
      %309 = vst.msk [vmem:[#allocation2 + $0x41] sm:$0x1] %vm288, 0.0
      %310 = vst.msk [vmem:[#allocation2 + $0x59] sm:$0x1] %vm288, 0.0
      %311 = vst.msk [vmem:[#allocation2 + $0x71] sm:$0x1] %vm288, 0.0
      %312 = vst.msk [vmem:[#allocation2 + $0x89] sm:$0x1] %vm288, 0.0
      %313 = vst.msk [vmem:[#allocation2 + $0xa1] sm:$0x1] %vm288, 0.0
      %314 = vst.msk [vmem:[#allocation2 + $0xb9] sm:$0x1] %vm288, 0.0
      %315 = vst.msk [vmem:[#allocation2 + $0xd1] sm:$0x1] %vm288, 0.0
      %316 = vst.msk [vmem:[#allocation2 + $0xe9] sm:$0x1] %vm288, 0.0
      %317 = vst.msk [vmem:[#allocation2 + $0x101] sm:$0x1] %vm288, 0.0
      %318 = vst.msk [vmem:[#allocation2 + $0x119] sm:$0x1] %vm288, 0.0
      %319 = vst.msk [vmem:[#allocation2 + $0x131] sm:$0x1] %vm288, 0.0
      %320 = vst.msk [vmem:[#allocation2 + $0x149] sm:$0x1] %vm288, 0.0
      %321 = vst.msk [vmem:[#allocation2 + $0x161] sm:$0x1] %vm288, 0.0
      %322 = vst.msk [vmem:[#allocation2 + $0x179] sm:$0x1] %vm288, 0.0
      %323 = vst.msk [vmem:[#allocation2 + $0x191] sm:$0x1] %vm288, 0.0
      %324 = vst.msk [vmem:[#allocation2 + $0x1a9] sm:$0x1] %vm288, 0.0
      %325 = vst.msk [vmem:[#allocation3] sm:$0xff] %vm279, 0.0
      %326 = vst.msk [vmem:[#allocation3 + $0x8] sm:$0xff] %vm279, 0.0
      %327 = vst.msk [vmem:[#allocation3 + $0x10] sm:$0x3] %vm282, 0.0
      %s328 = scalar_lea.vmem [#allocation3], 408
      %329 = vst.msk [vmem:[%s328] sm:$0xff] %vm279, 0.0
      %330 = vst.msk [vmem:[%s328 + $0x8] sm:$0xff] %vm279, 0.0
      %331 = vst.msk [vmem:[%s328 + $0x10] sm:$0x3] %vm282, 0.0
      %332 = vst.msk [vmem:[#allocation3] sm:$0x1] %vm288, 0.0
      %333 = vst.msk [vmem:[#allocation3 + $0x18] sm:$0x1] %vm288, 0.0
      %334 = vst.msk [vmem:[#allocation3 + $0x30] sm:$0x1] %vm288, 0.0
      %335 = vst.msk [vmem:[#allocation3 + $0x48] sm:$0x1] %vm288, 0.0
      %336 = vst.msk [vmem:[#allocation3 + $0x60] sm:$0x1] %vm288, 0.0
      %337 = vst.msk [vmem:[#allocation3 + $0x78] sm:$0x1] %vm288, 0.0
      %338 = vst.msk [vmem:[#allocation3 + $0x90] sm:$0x1] %vm288, 0.0
      %339 = vst.msk [vmem:[#allocation3 + $0xa8] sm:$0x1] %vm288, 0.0
      %340 = vst.msk [vmem:[#allocation3 + $0xc0] sm:$0x1] %vm288, 0.0
      %341 = vst.msk [vmem:[#allocation3 + $0xd8] sm:$0x1] %vm288, 0.0
      %342 = vst.msk [vmem:[#allocation3 + $0xf0] sm:$0x1] %vm288, 0.0
      %343 = vst.msk [vmem:[#allocation3 + $0x108] sm:$0x1] %vm288, 0.0
      %344 = vst.msk [vmem:[#allocation3 + $0x120] sm:$0x1] %vm288, 0.0
      %345 = vst.msk [vmem:[#allocation3 + $0x138] sm:$0x1] %vm288, 0.0
      %346 = vst.msk [vmem:[#allocation3 + $0x150] sm:$0x1] %vm288, 0.0
      %347 = vst.msk [vmem:[#allocation3 + $0x168] sm:$0x1] %vm288, 0.0
      %348 = vst.msk [vmem:[#allocation3 + $0x180] sm:$0x1] %vm288, 0.0
      %349 = vst.msk [vmem:[#allocation3 + $0x198] sm:$0x1] %vm288, 0.0
      %350 = vst.msk [vmem:[#allocation3 + $0x11] sm:$0x1] %vm288, 0.0
      %351 = vst.msk [vmem:[#allocation3 + $0x29] sm:$0x1] %vm288, 0.0
      %352 = vst.msk [vmem:[#allocation3 + $0x41] sm:$0x1] %vm288, 0.0
      %353 = vst.msk [vmem:[#allocation3 + $0x59] sm:$0x1] %vm288, 0.0
      %354 = vst.msk [vmem:[#allocation3 + $0x71] sm:$0x1] %vm288, 0.0
      %355 = vst.msk [vmem:[#allocation3 + $0x89] sm:$0x1] %vm288, 0.0
      %356 = vst.msk [vmem:[#allocation3 + $0xa1] sm:$0x1] %vm288, 0.0
      %357 = vst.msk [vmem:[#allocation3 + $0xb9] sm:$0x1] %vm288, 0.0
      %358 = vst.msk [vmem:[#allocation3 + $0xd1] sm:$0x1] %vm288, 0.0
      %359 = vst.msk [vmem:[#allocation3 + $0xe9] sm:$0x1] %vm288, 0.0
      %360 = vst.msk [vmem:[#allocation3 + $0x101] sm:$0x1] %vm288, 0.0
      %361 = vst.msk [vmem:[#allocation3 + $0x119] sm:$0x1] %vm288, 0.0
      %362 = vst.msk [vmem:[#allocation3 + $0x131] sm:$0x1] %vm288, 0.0
      %363 = vst.msk [vmem:[#allocation3 + $0x149] sm:$0x1] %vm288, 0.0
      %364 = vst.msk [vmem:[#allocation3 + $0x161] sm:$0x1] %vm288, 0.0
      %365 = vst.msk [vmem:[#allocation3 + $0x179] sm:$0x1] %vm288, 0.0
      %366 = vst.msk [vmem:[#allocation3 + $0x191] sm:$0x1] %vm288, 0.0
      %367 = vst.msk [vmem:[#allocation3 + $0x1a9] sm:$0x1] %vm288, 0.0
      %v368 = vld [vmem:[%s273] sm:$0xff]
      %v369 = vld [vmem:[%s273 + $0x8] sm:$0xff]
      %v370 = vld [vmem:[%s273 + $0x10] sm:$0xff]
      %v371 = vld [vmem:[%s273 + $0x18] sm:$0xff]
      %v372 = vld [vmem:[%s273 + $0x20] sm:$0xff]
      %v373 = vld [vmem:[%s273 + $0x28] sm:$0xff]
      %v374 = vld [vmem:[%s273 + $0x30] sm:$0xff]
      %v375 = vld [vmem:[%s273 + $0x38] sm:$0xff]
      %v376 = vld [vmem:[%s273 + $0x40] sm:$0xff]
      %v377 = vld [vmem:[%s273 + $0x48] sm:$0xff]
      %v378 = vld [vmem:[%s273 + $0x50] sm:$0xff]
      %v379 = vld [vmem:[%s273 + $0x58] sm:$0xff]
      %v380 = vld [vmem:[%s273 + $0x60] sm:$0xff]
      %v381 = vld [vmem:[%s273 + $0x68] sm:$0xff]
      %v382 = vld [vmem:[%s273 + $0x70] sm:$0xff]
      %v383 = vld [vmem:[%s273 + $0x78] sm:$0xff]
      %v384 = vld [vmem:[%s273 + $0x80] sm:$0xff]
      %v385 = vld [vmem:[%s273 + $0x88] sm:$0xff]
      %v386 = vld [vmem:[%s273 + $0x90] sm:$0xff]
      %v387 = vld [vmem:[%s273 + $0x98] sm:$0xff]
      %v388 = vld [vmem:[%s273 + $0xa0] sm:$0xff]
      %v389 = vld [vmem:[%s273 + $0xa8] sm:$0xff]
      %v390 = vld [vmem:[%s273 + $0xb0] sm:$0xff]
      %v391 = vld [vmem:[%s273 + $0xb8] sm:$0xff]
      %v392 = vld [vmem:[%s273 + $0xc0] sm:$0xff]
      %v393 = vld [vmem:[%s273 + $0xc8] sm:$0xff]
      %v394 = vld [vmem:[%s273 + $0xd0] sm:$0xff]
      %v395 = vld [vmem:[%s273 + $0xd8] sm:$0xff]
      %v396 = vld [vmem:[%s273 + $0xe0] sm:$0xff]
      %v397 = vld [vmem:[%s273 + $0xe8] sm:$0xff]
      %v398 = vld [vmem:[%s273 + $0xf0] sm:$0xff]
      %v399 = vld [vmem:[%s273 + $0xf8] sm:$0xff]
      %s400 = scalar_lea.vmem [#allocation2], 24
      %401 = vst.msk [vmem:[%s400 + $0x1] sm:$0xff] %vm279, %v368
      %402 = vst.msk [vmem:[%s400 + $0x9] sm:$0xff] %vm279, %v369
      %403 = vst.msk [vmem:[%s400 + $0x19] sm:$0xff] %vm279, %v370
      %404 = vst.msk [vmem:[%s400 + $0x21] sm:$0xff] %vm279, %v371
      %405 = vst.msk [vmem:[%s400 + $0x31] sm:$0xff] %vm279, %v372
      %406 = vst.msk [vmem:[%s400 + $0x39] sm:$0xff] %vm279, %v373
      %407 = vst.msk [vmem:[%s400 + $0x49] sm:$0xff] %vm279, %v374
      %408 = vst.msk [vmem:[%s400 + $0x51] sm:$0xff] %vm279, %v375
      %409 = vst.msk [vmem:[%s400 + $0x61] sm:$0xff] %vm279, %v376
      %410 = vst.msk [vmem:[%s400 + $0x69] sm:$0xff] %vm279, %v377
      %411 = vst.msk [vmem:[%s400 + $0x79] sm:$0xff] %vm279, %v378
      %412 = vst.msk [vmem:[%s400 + $0x81] sm:$0xff] %vm279, %v379
      %413 = vst.msk [vmem:[%s400 + $0x91] sm:$0xff] %vm279, %v380
      %414 = vst.msk [vmem:[%s400 + $0x99] sm:$0xff] %vm279, %v381
      %415 = vst.msk [vmem:[%s400 + $0xa9] sm:$0xff] %vm279, %v382
      %416 = vst.msk [vmem:[%s400 + $0xb1] sm:$0xff] %vm279, %v383
      %417 = vst.msk [vmem:[%s400 + $0xc1] sm:$0xff] %vm279, %v384
      %418 = vst.msk [vmem:[%s400 + $0xc9] sm:$0xff] %vm279, %v385
      %419 = vst.msk [vmem:[%s400 + $0xd9] sm:$0xff] %vm279, %v386
      %420 = vst.msk [vmem:[%s400 + $0xe1] sm:$0xff] %vm279, %v387
      %421 = vst.msk [vmem:[%s400 + $0xf1] sm:$0xff] %vm279, %v388
      %422 = vst.msk [vmem:[%s400 + $0xf9] sm:$0xff] %vm279, %v389
      %423 = vst.msk [vmem:[%s400 + $0x109] sm:$0xff] %vm279, %v390
      %424 = vst.msk [vmem:[%s400 + $0x111] sm:$0xff] %vm279, %v391
      %425 = vst.msk [vmem:[%s400 + $0x121] sm:$0xff] %vm279, %v392
      %426 = vst.msk [vmem:[%s400 + $0x129] sm:$0xff] %vm279, %v393
      %427 = vst.msk [vmem:[%s400 + $0x139] sm:$0xff] %vm279, %v394
      %428 = vst.msk [vmem:[%s400 + $0x141] sm:$0xff] %vm279, %v395
      %429 = vst.msk [vmem:[%s400 + $0x151] sm:$0xff] %vm279, %v396
      %430 = vst.msk [vmem:[%s400 + $0x159] sm:$0xff] %vm279, %v397
      %431 = vst.msk [vmem:[%s400 + $0x169] sm:$0xff] %vm279, %v398
      %432 = vst.msk [vmem:[%s400 + $0x171] sm:$0xff] %vm279, %v399
      %v433 = vld [vmem:[#allocation2] sm:$0xff]
      %v434 = vld [vmem:[#allocation2 + $0x8] sm:$0xff]
      %v435 = vld [vmem:[#allocation2 + $0x10] sm:$0x3]
      %v436 = vld [vmem:[#allocation2 + $0x18] sm:$0xff]
      %v437 = vld [vmem:[#allocation2 + $0x20] sm:$0xff]
      %v438 = vld [vmem:[#allocation2 + $0x28] sm:$0x3]
      %v439 = vld [vmem:[#allocation2 + $0x30] sm:$0xff]
      %v440 = vld [vmem:[#allocation2 + $0x38] sm:$0xff]
      %v441 = vld [vmem:[#allocation2 + $0x40] sm:$0x3]
      %v442 = vld [vmem:[#allocation2 + $0x48] sm:$0xff]
      %v443 = vld [vmem:[#allocation2 + $0x50] sm:$0xff]
      %v444 = vld [vmem:[#allocation2 + $0x58] sm:$0x3]
      %v445 = vld [vmem:[#allocation2 + $0x60] sm:$0xff]
      %v446 = vld [vmem:[#allocation2 + $0x68] sm:$0xff]
      %v447 = vld [vmem:[#allocation2 + $0x70] sm:$0x3]
      %v448 = vld [vmem:[#allocation2 + $0x78] sm:$0xff]
      %v449 = vld [vmem:[#allocation2 + $0x80] sm:$0xff]
      %v450 = vld [vmem:[#allocation2 + $0x88] sm:$0x3]
      %v451 = vld [vmem:[#allocation2 + $0x90] sm:$0xff]
      %v452 = vld [vmem:[#allocation2 + $0x98] sm:$0xff]
      %v453 = vld [vmem:[#allocation2 + $0xa0] sm:$0x3]
      %v454 = vld [vmem:[#allocation2 + $0xa8] sm:$0xff]
      %v455 = vld [vmem:[#allocation2 + $0xb0] sm:$0xff]
      %v456 = vld [vmem:[#allocation2 + $0xb8] sm:$0x3]
      %v457 = vld [vmem:[#allocation2 + $0xc0] sm:$0xff]
      %v458 = vld [vmem:[#allocation2 + $0xc8] sm:$0xff]
      %v459 = vld [vmem:[#allocation2 + $0xd0] sm:$0x3]
      %v460 = vld [vmem:[#allocation2 + $0xd8] sm:$0xff]
      %v461 = vld [vmem:[#allocation2 + $0xe0] sm:$0xff]
      %v462 = vld [vmem:[#allocation2 + $0xe8] sm:$0x3]
      %v463 = vld [vmem:[#allocation2 + $0xf0] sm:$0xff]
      %v464 = vld [vmem:[#allocation2 + $0xf8] sm:$0xff]
      %v465 = vld [vmem:[#allocation2 + $0x100] sm:$0x3]
      %v466 = vld [vmem:[#allocation2 + $0x108] sm:$0xff]
      %v467 = vld [vmem:[#allocation2 + $0x110] sm:$0xff]
      %v468 = vld [vmem:[#allocation2 + $0x118] sm:$0x3]
      %v469 = vld [vmem:[#allocation2 + $0x120] sm:$0xff]
      %v470 = vld [vmem:[#allocation2 + $0x128] sm:$0xff]
      %v471 = vld [vmem:[#allocation2 + $0x130] sm:$0x3]
      %v472 = vld [vmem:[#allocation2 + $0x138] sm:$0xff]
      %v473 = vld [vmem:[#allocation2 + $0x140] sm:$0xff]
      %v474 = vld [vmem:[#allocation2 + $0x148] sm:$0x3]
      %v475 = vld [vmem:[#allocation2 + $0x150] sm:$0xff]
      %v476 = vld [vmem:[#allocation2 + $0x158] sm:$0xff]
      %v477 = vld [vmem:[#allocation2 + $0x160] sm:$0x3]
      %v478 = vld [vmem:[#allocation2 + $0x168] sm:$0xff]
      %v479 = vld [vmem:[#allocation2 + $0x170] sm:$0xff]
      %v480 = vld [vmem:[#allocation2 + $0x178] sm:$0x3]
      %v481 = vld [vmem:[#allocation2 + $0x180] sm:$0xff]
      %v482 = vld [vmem:[#allocation2 + $0x188] sm:$0xff]
      %v483 = vld [vmem:[#allocation2 + $0x190] sm:$0x3]
      %v484 = vld [vmem:[#allocation2 + $0x198] sm:$0xff]
      %v485 = vld [vmem:[#allocation2 + $0x1a0] sm:$0xff]
      %v486 = vld [vmem:[#allocation2 + $0x1a8] sm:$0x3]
      %vm541 = vcmask 1046528
      %v542 = vrot.slane %v433, 1
      %v543 = vrot.slane %v434, 1
      %v544 = vsel %vm541, %v542, %v543
      %v545 = vrot.slane %v435, 1
      %v546 = vsel %vm541, %v543, %v545
      %v547 = vrot.slane %v436, 1
      %v548 = vrot.slane %v437, 1
      %v549 = vsel %vm541, %v547, %v548
      %v550 = vrot.slane %v438, 1
      %v551 = vsel %vm541, %v548, %v550
      %v552 = vrot.slane %v439, 1
      %v553 = vrot.slane %v440, 1
      %v554 = vsel %vm541, %v552, %v553
      %v555 = vrot.slane %v441, 1
      %v556 = vsel %vm541, %v553, %v555
      %v557 = vrot.slane %v442, 1
      %v558 = vrot.slane %v443, 1
      %v559 = vsel %vm541, %v557, %v558
      %v560 = vrot.slane %v444, 1
      %v561 = vsel %vm541, %v558, %v560
      %v562 = vrot.slane %v445, 1
      %v563 = vrot.slane %v446, 1
      %v564 = vsel %vm541, %v562, %v563
      %v565 = vrot.slane %v447, 1
      %v566 = vsel %vm541, %v563, %v565
      %v567 = vrot.slane %v448, 1
      %v568 = vrot.slane %v449, 1
      %v569 = vsel %vm541, %v567, %v568
      %v570 = vrot.slane %v450, 1
      %v571 = vsel %vm541, %v568, %v570
      %v572 = vrot.slane %v451, 1
      %v573 = vrot.slane %v452, 1
      %v574 = vsel %vm541, %v572, %v573
      %v575 = vrot.slane %v453, 1
      %v576 = vsel %vm541, %v573, %v575
      %v577 = vrot.slane %v454, 1
      %v578 = vrot.slane %v455, 1
      %v579 = vsel %vm541, %v577, %v578
      %v580 = vrot.slane %v456, 1
      %v581 = vsel %vm541, %v578, %v580
      %v582 = vrot.slane %v457, 1
      %v583 = vrot.slane %v458, 1
      %v584 = vsel %vm541, %v582, %v583
      %v585 = vrot.slane %v459, 1
      %v586 = vsel %vm541, %v583, %v585
      %v587 = vrot.slane %v460, 1
      %v588 = vrot.slane %v461, 1
      %v589 = vsel %vm541, %v587, %v588
      %v590 = vrot.slane %v462, 1
      %v591 = vsel %vm541, %v588, %v590
      %v592 = vrot.slane %v463, 1
      %v593 = vrot.slane %v464, 1
      %v594 = vsel %vm541, %v592, %v593
      %v595 = vrot.slane %v465, 1
      %v596 = vsel %vm541, %v593, %v595
      %v597 = vrot.slane %v466, 1
      %v598 = vrot.slane %v467, 1
      %v599 = vsel %vm541, %v597, %v598
      %v600 = vrot.slane %v468, 1
      %v601 = vsel %vm541, %v598, %v600
      %v602 = vrot.slane %v469, 1
      %v603 = vrot.slane %v470, 1
      %v604 = vsel %vm541, %v602, %v603
      %v605 = vrot.slane %v471, 1
      %v606 = vsel %vm541, %v603, %v605
      %v607 = vrot.slane %v472, 1
      %v608 = vrot.slane %v473, 1
      %v609 = vsel %vm541, %v607, %v608
      %v610 = vrot.slane %v474, 1
      %v611 = vsel %vm541, %v608, %v610
      %v612 = vrot.slane %v475, 1
      %v613 = vrot.slane %v476, 1
      %v614 = vsel %vm541, %v612, %v613
      %v615 = vrot.slane %v477, 1
      %v616 = vsel %vm541, %v613, %v615
      %v617 = vrot.slane %v478, 1
      %v618 = vrot.slane %v479, 1
      %v619 = vsel %vm541, %v617, %v618
      %v620 = vrot.slane %v480, 1
      %v621 = vsel %vm541, %v618, %v620
      %v622 = vrot.slane %v481, 1
      %v623 = vrot.slane %v482, 1
      %v624 = vsel %vm541, %v622, %v623
      %v625 = vrot.slane %v483, 1
      %v626 = vsel %vm541, %v623, %v625
      %v627 = vrot.slane %v484, 1
      %v628 = vrot.slane %v485, 1
      %v629 = vsel %vm541, %v627, %v628
      %v630 = vrot.slane %v486, 1
      %v631 = vsel %vm541, %v628, %v630
      %632 = vrot.lane.b32.xlu0 %v544, 8
      %v633 = vpop.permute.xlu0 %632
      %634 = vrot.lane.b32.xlu0 %v546, 8
      %v635 = vpop.permute.xlu0 %634
      %636 = vrot.lane.b32.xlu0 %v549, 8
      %v637 = vpop.permute.xlu0 %636
      %638 = vrot.lane.b32.xlu0 %v551, 8
      %v639 = vpop.permute.xlu0 %638
      %640 = vrot.lane.b32.xlu0 %v554, 8
      %v641 = vpop.permute.xlu0 %640
      %642 = vrot.lane.b32.xlu0 %v556, 8
      %v643 = vpop.permute.xlu0 %642
      %644 = vrot.lane.b32.xlu0 %v559, 8
      %v645 = vpop.permute.xlu0 %644
      %646 = vrot.lane.b32.xlu0 %v561, 8
      %v647 = vpop.permute.xlu0 %646
      %648 = vrot.lane.b32.xlu0 %v564, 8
      %v649 = vpop.permute.xlu0 %648
      %650 = vrot.lane.b32.xlu0 %v566, 8
      %v651 = vpop.permute.xlu0 %650
      %652 = vrot.lane.b32.xlu0 %v569, 8
      %v653 = vpop.permute.xlu0 %652
      %654 = vrot.lane.b32.xlu0 %v571, 8
      %v655 = vpop.permute.xlu0 %654
      %656 = vrot.lane.b32.xlu0 %v574, 8
      %v657 = vpop.permute.xlu0 %656
      %658 = vrot.lane.b32.xlu0 %v576, 8
      %v659 = vpop.permute.xlu0 %658
      %660 = vrot.lane.b32.xlu0 %v579, 8
      %v661 = vpop.permute.xlu0 %660
      %662 = vrot.lane.b32.xlu0 %v581, 8
      %v663 = vpop.permute.xlu0 %662
      %664 = vrot.lane.b32.xlu0 %v584, 8
      %v665 = vpop.permute.xlu0 %664
      %666 = vrot.lane.b32.xlu0 %v586, 8
      %v667 = vpop.permute.xlu0 %666
      %668 = vrot.lane.b32.xlu0 %v589, 8
      %v669 = vpop.permute.xlu0 %668
      %670 = vrot.lane.b32.xlu0 %v591, 8
      %v671 = vpop.permute.xlu0 %670
      %672 = vrot.lane.b32.xlu0 %v594, 8
      %v673 = vpop.permute.xlu0 %672
      %674 = vrot.lane.b32.xlu0 %v596, 8
      %v675 = vpop.permute.xlu0 %674
      %676 = vrot.lane.b32.xlu0 %v599, 8
      %v677 = vpop.permute.xlu0 %676
      %678 = vrot.lane.b32.xlu0 %v601, 8
      %v679 = vpop.permute.xlu0 %678
      %680 = vrot.lane.b32.xlu0 %v604, 8
      %v681 = vpop.permute.xlu0 %680
      %682 = vrot.lane.b32.xlu0 %v606, 8
      %v683 = vpop.permute.xlu0 %682
      %684 = vrot.lane.b32.xlu0 %v609, 8
      %v685 = vpop.permute.xlu0 %684
      %686 = vrot.lane.b32.xlu0 %v611, 8
      %v687 = vpop.permute.xlu0 %686
      %688 = vrot.lane.b32.xlu0 %v614, 8
      %v689 = vpop.permute.xlu0 %688
      %690 = vrot.lane.b32.xlu0 %v616, 8
      %v691 = vpop.permute.xlu0 %690
      %692 = vrot.lane.b32.xlu0 %v619, 8
      %v693 = vpop.permute.xlu0 %692
      %694 = vrot.lane.b32.xlu0 %v621, 8
      %v695 = vpop.permute.xlu0 %694
      %696 = vrot.lane.b32.xlu0 %v624, 8
      %v697 = vpop.permute.xlu0 %696
      %698 = vrot.lane.b32.xlu0 %v626, 8
      %v699 = vpop.permute.xlu0 %698
      %700 = vrot.lane.b32.xlu0 %v629, 8
      %v701 = vpop.permute.xlu0 %700
      %702 = vrot.lane.b32.xlu0 %v631, 8
      %v703 = vpop.permute.xlu0 %702
      %vm740 = vcmask 1045504
      %v741 = vrot.slane %v433, 2
      %v742 = vrot.slane %v434, 2
      %v743 = vsel %vm740, %v741, %v742
      %v744 = vrot.slane %v435, 2
      %v745 = vsel %vm740, %v742, %v744
      %v746 = vrot.slane %v436, 2
      %v747 = vrot.slane %v437, 2
      %v748 = vsel %vm740, %v746, %v747
      %v749 = vrot.slane %v438, 2
      %v750 = vsel %vm740, %v747, %v749
      %v751 = vrot.slane %v439, 2
      %v752 = vrot.slane %v440, 2
      %v753 = vsel %vm740, %v751, %v752
      %v754 = vrot.slane %v441, 2
      %v755 = vsel %vm740, %v752, %v754
      %v756 = vrot.slane %v442, 2
      %v757 = vrot.slane %v443, 2
      %v758 = vsel %vm740, %v756, %v757
      %v759 = vrot.slane %v444, 2
      %v760 = vsel %vm740, %v757, %v759
      %v761 = vrot.slane %v445, 2
      %v762 = vrot.slane %v446, 2
      %v763 = vsel %vm740, %v761, %v762
      %v764 = vrot.slane %v447, 2
      %v765 = vsel %vm740, %v762, %v764
      %v766 = vrot.slane %v448, 2
      %v767 = vrot.slane %v449, 2
      %v768 = vsel %vm740, %v766, %v767
      %v769 = vrot.slane %v450, 2
      %v770 = vsel %vm740, %v767, %v769
      %v771 = vrot.slane %v451, 2
      %v772 = vrot.slane %v452, 2
      %v773 = vsel %vm740, %v771, %v772
      %v774 = vrot.slane %v453, 2
      %v775 = vsel %vm740, %v772, %v774
      %v776 = vrot.slane %v454, 2
      %v777 = vrot.slane %v455, 2
      %v778 = vsel %vm740, %v776, %v777
      %v779 = vrot.slane %v456, 2
      %v780 = vsel %vm740, %v777, %v779
      %v781 = vrot.slane %v457, 2
      %v782 = vrot.slane %v458, 2
      %v783 = vsel %vm740, %v781, %v782
      %v784 = vrot.slane %v459, 2
      %v785 = vsel %vm740, %v782, %v784
      %v786 = vrot.slane %v460, 2
      %v787 = vrot.slane %v461, 2
      %v788 = vsel %vm740, %v786, %v787
      %v789 = vrot.slane %v462, 2
      %v790 = vsel %vm740, %v787, %v789
      %v791 = vrot.slane %v463, 2
      %v792 = vrot.slane %v464, 2
      %v793 = vsel %vm740, %v791, %v792
      %v794 = vrot.slane %v465, 2
      %v795 = vsel %vm740, %v792, %v794
      %v796 = vrot.slane %v466, 2
      %v797 = vrot.slane %v467, 2
      %v798 = vsel %vm740, %v796, %v797
      %v799 = vrot.slane %v468, 2
      %v800 = vsel %vm740, %v797, %v799
      %v801 = vrot.slane %v469, 2
      %v802 = vrot.slane %v470, 2
      %v803 = vsel %vm740, %v801, %v802
      %v804 = vrot.slane %v471, 2
      %v805 = vsel %vm740, %v802, %v804
      %v806 = vrot.slane %v472, 2
      %v807 = vrot.slane %v473, 2
      %v808 = vsel %vm740, %v806, %v807
      %v809 = vrot.slane %v474, 2
      %v810 = vsel %vm740, %v807, %v809
      %v811 = vrot.slane %v475, 2
      %v812 = vrot.slane %v476, 2
      %v813 = vsel %vm740, %v811, %v812
      %v814 = vrot.slane %v477, 2
      %v815 = vsel %vm740, %v812, %v814
      %v816 = vrot.slane %v478, 2
      %v817 = vrot.slane %v479, 2
      %v818 = vsel %vm740, %v816, %v817
      %v819 = vrot.slane %v480, 2
      %v820 = vsel %vm740, %v817, %v819
      %v821 = vrot.slane %v481, 2
      %v822 = vrot.slane %v482, 2
      %v823 = vsel %vm740, %v821, %v822
      %v824 = vrot.slane %v483, 2
      %v825 = vsel %vm740, %v822, %v824
      %v826 = vrot.slane %v484, 2
      %v827 = vrot.slane %v485, 2
      %v828 = vsel %vm740, %v826, %v827
      %v829 = vrot.slane %v486, 2
      %v830 = vsel %vm740, %v827, %v829
      %831 = vrot.lane.b32.xlu0 %v743, 16
      %v832 = vpop.permute.xlu0 %831
      %833 = vrot.lane.b32.xlu0 %v745, 16
      %v834 = vpop.permute.xlu0 %833
      %835 = vrot.lane.b32.xlu0 %v748, 16
      %v836 = vpop.permute.xlu0 %835
      %837 = vrot.lane.b32.xlu0 %v750, 16
      %v838 = vpop.permute.xlu0 %837
      %839 = vrot.lane.b32.xlu0 %v753, 16
      %v840 = vpop.permute.xlu0 %839
      %841 = vrot.lane.b32.xlu0 %v755, 16
      %v842 = vpop.permute.xlu0 %841
      %843 = vrot.lane.b32.xlu0 %v758, 16
      %v844 = vpop.permute.xlu0 %843
      %845 = vrot.lane.b32.xlu0 %v760, 16
      %v846 = vpop.permute.xlu0 %845
      %847 = vrot.lane.b32.xlu0 %v763, 16
      %v848 = vpop.permute.xlu0 %847
      %849 = vrot.lane.b32.xlu0 %v765, 16
      %v850 = vpop.permute.xlu0 %849
      %851 = vrot.lane.b32.xlu0 %v768, 16
      %v852 = vpop.permute.xlu0 %851
      %853 = vrot.lane.b32.xlu0 %v770, 16
      %v854 = vpop.permute.xlu0 %853
      %855 = vrot.lane.b32.xlu0 %v773, 16
      %v856 = vpop.permute.xlu0 %855
      %857 = vrot.lane.b32.xlu0 %v775, 16
      %v858 = vpop.permute.xlu0 %857
      %859 = vrot.lane.b32.xlu0 %v778, 16
      %v860 = vpop.permute.xlu0 %859
      %861 = vrot.lane.b32.xlu0 %v780, 16
      %v862 = vpop.permute.xlu0 %861
      %863 = vrot.lane.b32.xlu0 %v783, 16
      %v864 = vpop.permute.xlu0 %863
      %865 = vrot.lane.b32.xlu0 %v785, 16
      %v866 = vpop.permute.xlu0 %865
      %867 = vrot.lane.b32.xlu0 %v788, 16
      %v868 = vpop.permute.xlu0 %867
      %869 = vrot.lane.b32.xlu0 %v790, 16
      %v870 = vpop.permute.xlu0 %869
      %871 = vrot.lane.b32.xlu0 %v793, 16
      %v872 = vpop.permute.xlu0 %871
      %873 = vrot.lane.b32.xlu0 %v795, 16
      %v874 = vpop.permute.xlu0 %873
      %875 = vrot.lane.b32.xlu0 %v798, 16
      %v876 = vpop.permute.xlu0 %875
      %877 = vrot.lane.b32.xlu0 %v800, 16
      %v878 = vpop.permute.xlu0 %877
      %879 = vrot.lane.b32.xlu0 %v803, 16
      %v880 = vpop.permute.xlu0 %879
      %881 = vrot.lane.b32.xlu0 %v805, 16
      %v882 = vpop.permute.xlu0 %881
      %883 = vrot.lane.b32.xlu0 %v808, 16
      %v884 = vpop.permute.xlu0 %883
      %885 = vrot.lane.b32.xlu0 %v810, 16
      %v886 = vpop.permute.xlu0 %885
      %887 = vrot.lane.b32.xlu0 %v813, 16
      %v888 = vpop.permute.xlu0 %887
      %889 = vrot.lane.b32.xlu0 %v815, 16
      %v890 = vpop.permute.xlu0 %889
      %891 = vrot.lane.b32.xlu0 %v818, 16
      %v892 = vpop.permute.xlu0 %891
      %893 = vrot.lane.b32.xlu0 %v820, 16
      %v894 = vpop.permute.xlu0 %893
      %895 = vrot.lane.b32.xlu0 %v823, 16
      %v896 = vpop.permute.xlu0 %895
      %897 = vrot.lane.b32.xlu0 %v825, 16
      %v898 = vpop.permute.xlu0 %897
      %899 = vrot.lane.b32.xlu0 %v828, 16
      %v900 = vpop.permute.xlu0 %899
      %901 = vrot.lane.b32.xlu0 %v830, 16
      %v902 = vpop.permute.xlu0 %901
      %v939 = vsel %vm279, %v433, %v633
      %v940 = vsel %vm279, %v434, %v635
      %v941 = vsel %vm279, %v436, %v637
      %v942 = vsel %vm279, %v437, %v639
      %v943 = vsel %vm279, %v439, %v641
      %v944 = vsel %vm279, %v440, %v643
      %v945 = vsel %vm279, %v442, %v645
      %v946 = vsel %vm279, %v443, %v647
      %v947 = vsel %vm279, %v445, %v649
      %v948 = vsel %vm279, %v446, %v651
      %v949 = vsel %vm279, %v448, %v653
      %v950 = vsel %vm279, %v449, %v655
      %v951 = vsel %vm279, %v451, %v657
      %v952 = vsel %vm279, %v452, %v659
      %v953 = vsel %vm279, %v454, %v661
      %v954 = vsel %vm279, %v455, %v663
      %v955 = vsel %vm279, %v457, %v665
      %v956 = vsel %vm279, %v458, %v667
      %v957 = vsel %vm279, %v460, %v669
      %v958 = vsel %vm279, %v461, %v671
      %v959 = vsel %vm279, %v463, %v673
      %v960 = vsel %vm279, %v464, %v675
      %v961 = vsel %vm279, %v466, %v677
      %v962 = vsel %vm279, %v467, %v679
      %v963 = vsel %vm279, %v469, %v681
      %v964 = vsel %vm279, %v470, %v683
      %v965 = vsel %vm279, %v472, %v685
      %v966 = vsel %vm279, %v473, %v687
      %v967 = vsel %vm279, %v475, %v689
      %v968 = vsel %vm279, %v476, %v691
      %v969 = vsel %vm279, %v478, %v693
      %v970 = vsel %vm279, %v479, %v695
      %v971 = vsel %vm279, %v481, %v697
      %v972 = vsel %vm279, %v482, %v699
      %v973 = vsel %vm279, %v484, %v701
      %v974 = vsel %vm279, %v485, %v703
      %vm975 = vcmask 130048
      %v976 = vsel %vm975, %v939, %v832
      %v977 = vsel %vm975, %v940, %v834
      %v978 = vsel %vm975, %v941, %v836
      %v979 = vsel %vm975, %v942, %v838
      %v980 = vsel %vm975, %v943, %v840
      %v981 = vsel %vm975, %v944, %v842
      %v982 = vsel %vm975, %v945, %v844
      %v983 = vsel %vm975, %v946, %v846
      %v984 = vsel %vm975, %v947, %v848
      %v985 = vsel %vm975, %v948, %v850
      %v986 = vsel %vm975, %v949, %v852
      %v987 = vsel %vm975, %v950, %v854
      %v988 = vsel %vm975, %v951, %v856
      %v989 = vsel %vm975, %v952, %v858
      %v990 = vsel %vm975, %v953, %v860
      %v991 = vsel %vm975, %v954, %v862
      %v992 = vsel %vm975, %v955, %v864
      %v993 = vsel %vm975, %v956, %v866
      %v994 = vsel %vm975, %v957, %v868
      %v995 = vsel %vm975, %v958, %v870
      %v996 = vsel %vm975, %v959, %v872
      %v997 = vsel %vm975, %v960, %v874
      %v998 = vsel %vm975, %v961, %v876
      %v999 = vsel %vm975, %v962, %v878
      %v1000 = vsel %vm975, %v963, %v880
      %v1001 = vsel %vm975, %v964, %v882
      %v1002 = vsel %vm975, %v965, %v884
      %v1003 = vsel %vm975, %v966, %v886
      %v1004 = vsel %vm975, %v967, %v888
      %v1005 = vsel %vm975, %v968, %v890
      %v1006 = vsel %vm975, %v969, %v892
      %v1007 = vsel %vm975, %v970, %v894
      %v1008 = vsel %vm975, %v971, %v896
      %v1009 = vsel %vm975, %v972, %v898
      %v1010 = vsel %vm975, %v973, %v900
      %v1011 = vsel %vm975, %v974, %v902
      %1044 = vrot.lane.b32.xlu0 %v978, 24
      %v1045 = vpop.permute.xlu0 %1044
      %1046 = vrot.lane.b32.xlu0 %v979, 24
      %v1047 = vpop.permute.xlu0 %1046
      %1048 = vrot.lane.b32.xlu0 %v980, 24
      %v1049 = vpop.permute.xlu0 %1048
      %1050 = vrot.lane.b32.xlu0 %v981, 24
      %v1051 = vpop.permute.xlu0 %1050
      %1052 = vrot.lane.b32.xlu0 %v982, 24
      %v1053 = vpop.permute.xlu0 %1052
      %1054 = vrot.lane.b32.xlu0 %v983, 24
      %v1055 = vpop.permute.xlu0 %1054
      %1056 = vrot.lane.b32.xlu0 %v984, 24
      %v1057 = vpop.permute.xlu0 %1056
      %1058 = vrot.lane.b32.xlu0 %v985, 24
      %v1059 = vpop.permute.xlu0 %1058
      %1060 = vrot.lane.b32.xlu0 %v986, 24
      %v1061 = vpop.permute.xlu0 %1060
      %1062 = vrot.lane.b32.xlu0 %v987, 24
      %v1063 = vpop.permute.xlu0 %1062
      %1064 = vrot.lane.b32.xlu0 %v988, 24
      %v1065 = vpop.permute.xlu0 %1064
      %1066 = vrot.lane.b32.xlu0 %v989, 24
      %v1067 = vpop.permute.xlu0 %1066
      %1068 = vrot.lane.b32.xlu0 %v990, 24
      %v1069 = vpop.permute.xlu0 %1068
      %1070 = vrot.lane.b32.xlu0 %v991, 24
      %v1071 = vpop.permute.xlu0 %1070
      %1072 = vrot.lane.b32.xlu0 %v992, 24
      %v1073 = vpop.permute.xlu0 %1072
      %1074 = vrot.lane.b32.xlu0 %v993, 24
      %v1075 = vpop.permute.xlu0 %1074
      %1076 = vrot.lane.b32.xlu0 %v994, 24
      %v1077 = vpop.permute.xlu0 %1076
      %1078 = vrot.lane.b32.xlu0 %v995, 24
      %v1079 = vpop.permute.xlu0 %1078
      %1080 = vrot.lane.b32.xlu0 %v996, 24
      %v1081 = vpop.permute.xlu0 %1080
      %1082 = vrot.lane.b32.xlu0 %v997, 24
      %v1083 = vpop.permute.xlu0 %1082
      %1084 = vrot.lane.b32.xlu0 %v998, 24
      %v1085 = vpop.permute.xlu0 %1084
      %1086 = vrot.lane.b32.xlu0 %v999, 24
      %v1087 = vpop.permute.xlu0 %1086
      %1088 = vrot.lane.b32.xlu0 %v1000, 24
      %v1089 = vpop.permute.xlu0 %1088
      %1090 = vrot.lane.b32.xlu0 %v1001, 24
      %v1091 = vpop.permute.xlu0 %1090
      %1092 = vrot.lane.b32.xlu0 %v1002, 24
      %v1093 = vpop.permute.xlu0 %1092
      %1094 = vrot.lane.b32.xlu0 %v1003, 24
      %v1095 = vpop.permute.xlu0 %1094
      %1096 = vrot.lane.b32.xlu0 %v1004, 24
      %v1097 = vpop.permute.xlu0 %1096
      %1098 = vrot.lane.b32.xlu0 %v1005, 24
      %v1099 = vpop.permute.xlu0 %1098
      %1100 = vrot.lane.b32.xlu0 %v1006, 24
      %v1101 = vpop.permute.xlu0 %1100
      %1102 = vrot.lane.b32.xlu0 %v1007, 24
      %v1103 = vpop.permute.xlu0 %1102
      %1104 = vrot.lane.b32.xlu0 %v1008, 24
      %v1105 = vpop.permute.xlu0 %1104
      %1106 = vrot.lane.b32.xlu0 %v1009, 24
      %v1107 = vpop.permute.xlu0 %1106
      %1142 = vrot.lane.b32.xlu0 %v980, 48
      %v1143 = vpop.permute.xlu0 %1142
      %1144 = vrot.lane.b32.xlu0 %v981, 48
      %v1145 = vpop.permute.xlu0 %1144
      %1146 = vrot.lane.b32.xlu0 %v982, 48
      %v1147 = vpop.permute.xlu0 %1146
      %1148 = vrot.lane.b32.xlu0 %v983, 48
      %v1149 = vpop.permute.xlu0 %1148
      %1150 = vrot.lane.b32.xlu0 %v984, 48
      %v1151 = vpop.permute.xlu0 %1150
      %1152 = vrot.lane.b32.xlu0 %v985, 48
      %v1153 = vpop.permute.xlu0 %1152
      %1154 = vrot.lane.b32.xlu0 %v986, 48
      %v1155 = vpop.permute.xlu0 %1154
      %1156 = vrot.lane.b32.xlu0 %v987, 48
      %v1157 = vpop.permute.xlu0 %1156
      %1158 = vrot.lane.b32.xlu0 %v988, 48
      %v1159 = vpop.permute.xlu0 %1158
      %1160 = vrot.lane.b32.xlu0 %v989, 48
      %v1161 = vpop.permute.xlu0 %1160
      %1162 = vrot.lane.b32.xlu0 %v990, 48
      %v1163 = vpop.permute.xlu0 %1162
      %1164 = vrot.lane.b32.xlu0 %v991, 48
      %v1165 = vpop.permute.xlu0 %1164
      %1166 = vrot.lane.b32.xlu0 %v992, 48
      %v1167 = vpop.permute.xlu0 %1166
      %1168 = vrot.lane.b32.xlu0 %v993, 48
      %v1169 = vpop.permute.xlu0 %1168
      %1170 = vrot.lane.b32.xlu0 %v994, 48
      %v1171 = vpop.permute.xlu0 %1170
      %1172 = vrot.lane.b32.xlu0 %v995, 48
      %v1173 = vpop.permute.xlu0 %1172
      %1174 = vrot.lane.b32.xlu0 %v996, 48
      %v1175 = vpop.permute.xlu0 %1174
      %1176 = vrot.lane.b32.xlu0 %v997, 48
      %v1177 = vpop.permute.xlu0 %1176
      %1178 = vrot.lane.b32.xlu0 %v998, 48
      %v1179 = vpop.permute.xlu0 %1178
      %1180 = vrot.lane.b32.xlu0 %v999, 48
      %v1181 = vpop.permute.xlu0 %1180
      %1182 = vrot.lane.b32.xlu0 %v1000, 48
      %v1183 = vpop.permute.xlu0 %1182
      %1184 = vrot.lane.b32.xlu0 %v1001, 48
      %v1185 = vpop.permute.xlu0 %1184
      %1186 = vrot.lane.b32.xlu0 %v1002, 48
      %v1187 = vpop.permute.xlu0 %1186
      %1188 = vrot.lane.b32.xlu0 %v1003, 48
      %v1189 = vpop.permute.xlu0 %1188
      %1190 = vrot.lane.b32.xlu0 %v1004, 48
      %v1191 = vpop.permute.xlu0 %1190
      %1192 = vrot.lane.b32.xlu0 %v1005, 48
      %v1193 = vpop.permute.xlu0 %1192
      %1194 = vrot.lane.b32.xlu0 %v1006, 48
      %v1195 = vpop.permute.xlu0 %1194
      %1196 = vrot.lane.b32.xlu0 %v1007, 48
      %v1197 = vpop.permute.xlu0 %1196
      %1198 = vrot.lane.b32.xlu0 %v1008, 48
      %v1199 = vpop.permute.xlu0 %1198
      %1200 = vrot.lane.b32.xlu0 %v1009, 48
      %v1201 = vpop.permute.xlu0 %1200
      %1202 = vrot.lane.b32.xlu0 %v1010, 48
      %v1203 = vpop.permute.xlu0 %1202
      %1204 = vrot.lane.b32.xlu0 %v1011, 48
      %v1205 = vpop.permute.xlu0 %1204
      %vm1238 = vcmask 195584
      %v1239 = vsel %vm1238, %v976, %v1045
      %v1240 = vsel %vm1238, %v977, %v1047
      %v1241 = vsel %vm1238, %v978, %v1049
      %v1242 = vsel %vm1238, %v979, %v1051
      %v1243 = vsel %vm1238, %v980, %v1053
      %v1244 = vsel %vm1238, %v981, %v1055
      %v1245 = vsel %vm1238, %v982, %v1057
      %v1246 = vsel %vm1238, %v983, %v1059
      %v1247 = vsel %vm1238, %v984, %v1061
      %v1248 = vsel %vm1238, %v985, %v1063
      %v1249 = vsel %vm1238, %v986, %v1065
      %v1250 = vsel %vm1238, %v987, %v1067
      %v1251 = vsel %vm1238, %v988, %v1069
      %v1252 = vsel %vm1238, %v989, %v1071
      %v1253 = vsel %vm1238, %v990, %v1073
      %v1254 = vsel %vm1238, %v991, %v1075
      %v1255 = vsel %vm1238, %v992, %v1077
      %v1256 = vsel %vm1238, %v993, %v1079
      %v1257 = vsel %vm1238, %v994, %v1081
      %v1258 = vsel %vm1238, %v995, %v1083
      %v1259 = vsel %vm1238, %v996, %v1085
      %v1260 = vsel %vm1238, %v997, %v1087
      %v1261 = vsel %vm1238, %v998, %v1089
      %v1262 = vsel %vm1238, %v999, %v1091
      %v1263 = vsel %vm1238, %v1000, %v1093
      %v1264 = vsel %vm1238, %v1001, %v1095
      %v1265 = vsel %vm1238, %v1002, %v1097
      %v1266 = vsel %vm1238, %v1003, %v1099
      %v1267 = vsel %vm1238, %v1004, %v1101
      %v1268 = vsel %vm1238, %v1005, %v1103
      %v1269 = vsel %vm1238, %v1006, %v1105
      %v1270 = vsel %vm1238, %v1007, %v1107
      %vm1271 = vcmask 392192
      %v1272 = vsel %vm1271, %v1239, %v1143
      %v1273 = vsel %vm1271, %v1240, %v1145
      %v1274 = vsel %vm1271, %v1241, %v1147
      %v1275 = vsel %vm1271, %v1242, %v1149
      %v1276 = vsel %vm1271, %v1243, %v1151
      %v1277 = vsel %vm1271, %v1244, %v1153
      %v1278 = vsel %vm1271, %v1245, %v1155
      %v1279 = vsel %vm1271, %v1246, %v1157
      %v1280 = vsel %vm1271, %v1247, %v1159
      %v1281 = vsel %vm1271, %v1248, %v1161
      %v1282 = vsel %vm1271, %v1249, %v1163
      %v1283 = vsel %vm1271, %v1250, %v1165
      %v1284 = vsel %vm1271, %v1251, %v1167
      %v1285 = vsel %vm1271, %v1252, %v1169
      %v1286 = vsel %vm1271, %v1253, %v1171
      %v1287 = vsel %vm1271, %v1254, %v1173
      %v1288 = vsel %vm1271, %v1255, %v1175
      %v1289 = vsel %vm1271, %v1256, %v1177
      %v1290 = vsel %vm1271, %v1257, %v1179
      %v1291 = vsel %vm1271, %v1258, %v1181
      %v1292 = vsel %vm1271, %v1259, %v1183
      %v1293 = vsel %vm1271, %v1260, %v1185
      %v1294 = vsel %vm1271, %v1261, %v1187
      %v1295 = vsel %vm1271, %v1262, %v1189
      %v1296 = vsel %vm1271, %v1263, %v1191
      %v1297 = vsel %vm1271, %v1264, %v1193
      %v1298 = vsel %vm1271, %v1265, %v1195
      %v1299 = vsel %vm1271, %v1266, %v1197
      %v1300 = vsel %vm1271, %v1267, %v1199
      %v1301 = vsel %vm1271, %v1268, %v1201
      %v1302 = vsel %vm1271, %v1269, %v1203
      %v1303 = vsel %vm1271, %v1270, %v1205
      %v1304 = vld [vmem:[%s1] sm:$0xff]
      %v1305 = vld [vmem:[%s1 + $0x8] sm:$0xff]
      %v1306 = vld [vmem:[%s1 + $0x10] sm:$0xff]
      %v1307 = vld [vmem:[%s1 + $0x18] sm:$0xff]
      %v1308 = vld [vmem:[%s1 + $0x20] sm:$0xff]
      %v1309 = vld [vmem:[%s1 + $0x28] sm:$0xff]
      %v1310 = vld [vmem:[%s1 + $0x30] sm:$0xff]
      %v1311 = vld [vmem:[%s1 + $0x38] sm:$0xff]
      %v1312 = vld [vmem:[%s1 + $0x40] sm:$0xff]
      %vm1313 = vcmask 588800
      %v1315 = vsel %vm1313, %v1272, 0
      %v1318 = vsel %vm1313, %v1273, 0
      %v1321 = vsel %vm1313, %v1274, 0
      %v1324 = vsel %vm1313, %v1275, 0
      %v1327 = vsel %vm1313, %v1276, 0
      %v1330 = vsel %vm1313, %v1277, 0
      %v1333 = vsel %vm1313, %v1278, 0
      %v1336 = vsel %vm1313, %v1279, 0
      %v1339 = vsel %vm1313, %v1280, 0
      %v1342 = vsel %vm1313, %v1281, 0
      %v1345 = vsel %vm1313, %v1282, 0
      %v1348 = vsel %vm1313, %v1283, 0
      %v1351 = vsel %vm1313, %v1284, 0
      %v1354 = vsel %vm1313, %v1285, 0
      %v1357 = vsel %vm1313, %v1286, 0
      %v1360 = vsel %vm1313, %v1287, 0
      %v1363 = vsel %vm1313, %v1288, 0
      %v1366 = vsel %vm1313, %v1289, 0
      %v1369 = vsel %vm1313, %v1290, 0
      %v1372 = vsel %vm1313, %v1291, 0
      %v1375 = vsel %vm1313, %v1292, 0
      %v1378 = vsel %vm1313, %v1293, 0
      %v1381 = vsel %vm1313, %v1294, 0
      %v1384 = vsel %vm1313, %v1295, 0
      %v1387 = vsel %vm1313, %v1296, 0
      %v1390 = vsel %vm1313, %v1297, 0
      %v1393 = vsel %vm1313, %v1298, 0
      %v1396 = vsel %vm1313, %v1299, 0
      %v1399 = vsel %vm1313, %v1300, 0
      %v1402 = vsel %vm1313, %v1301, 0
      %v1405 = vsel %vm1313, %v1302, 0
      %v1408 = vsel %vm1313, %v1303, 0
      %1410 = vmatprep.subr.mxu0 0.0
      %1411 = vmatpush1.msra.mxu0 %v1304
      %1412 = vmatprep.subr.mxu0 0.0
      %1413 = vmatpush1.msra.mxu0 %v1305
      %1414 = vmatprep.subr.mxu0 0.0
      %1415 = vmatpush1.msra.mxu0 %v1306
      %1416 = vmatprep.subr.mxu0 0.0
      %1417 = vmatpush1.msra.mxu0 %v1307
      %1418 = vmatprep.subr.mxu0 0.0
      %1419 = vmatpush1.msra.mxu0 %v1308
      %1420 = vmatprep.subr.mxu0 0.0
      %1421 = vmatpush1.msra.mxu0 %v1309
      %1422 = vmatprep.subr.mxu0 0.0
      %1423 = vmatpush1.msra.mxu0 %v1310
      %1424 = vmatprep.subr.mxu0 0.0
      %1425 = vmatpush1.msra.mxu0 %v1311
      %1426 = vmatprep.subr.mxu0 0.0
      %1427 = vmatpush1.msra.mxu0 %v1312
      %1428 = vmatprep.subr.mxu0 0.0
      %1429 = vmatpush1.msra.mxu0 0.0
      %1430 = vmatprep.subr.mxu0 0.0
      %1431 = vmatpush1.msra.mxu0 0.0
      %1432 = vmatprep.subr.mxu0 0.0
      %1433 = vmatpush1.msra.mxu0 0.0
      %1434 = vmatprep.subr.mxu0 0.0
      %1435 = vmatpush1.msra.mxu0 0.0
      %1436 = vmatprep.subr.mxu0 0.0
      %1437 = vmatpush1.msra.mxu0 0.0
      %1438 = vmatprep.subr.mxu0 0.0
      %1439 = vmatpush1.msra.mxu0 0.0
      %1440 = vmatprep.subr.mxu0 0.0
      %1441 = vmatpush1.msra.mxu0 0.0
      %1442 = vmatprep.subr.mxu0 0.0
      %1443 = vmatpush1.msra.mxu0 0.0
      %1444 = vmatprep.subr.mxu0 0.0
      %1445 = vmatpush1.msra.mxu0 0.0
      %1446 = vmatprep.subr.mxu0 0.0
      %1447 = vmatpush1.msra.mxu0 0.0
      %1448 = vmatprep.subr.mxu0 0.0
      %1449 = vmatpush1.msra.mxu0 0.0
      %1450 = vmatprep.subr.mxu0 0.0
      %1451 = vmatpush1.msra.mxu0 0.0
      %1452 = vmatprep.subr.mxu0 0.0
      %1453 = vmatpush1.msra.mxu0 0.0
      %1454 = vmatprep.subr.mxu0 0.0
      %1455 = vmatpush1.msra.mxu0 0.0
      %1456 = vmatprep.subr.mxu0 0.0
      %1457 = vmatpush1.msra.mxu0 0.0
      %1458 = vmatprep.subr.mxu0 0.0
      %1459 = vmatpush1.msra.mxu0 0.0
      %1460 = vmatprep.subr.mxu0 0.0
      %1461 = vmatpush1.msra.mxu0 0.0
      %1462 = vmatprep.subr.mxu0 0.0
      %1463 = vmatpush1.msra.mxu0 0.0
      %1464 = vmatprep.subr.mxu0 0.0
      %1465 = vmatpush1.msra.mxu0 0.0
      %1466 = vmatprep.subr.mxu0 0.0
      %1467 = vmatpush1.msra.mxu0 0.0
      %1468 = vmatprep.subr.mxu0 0.0
      %1469 = vmatpush1.msra.mxu0 0.0
      %1470 = vmatprep.subr.mxu0 0.0
      %1471 = vmatpush1.msra.mxu0 0.0
      %1472 = vmatprep.subr.mxu0 0.0
      %1473 = vmatpush1.msra.mxu0 0.0
      %1474 = vmatprep.mubr.f32.mxu0 0.0
      %1475 = vmatmul.mubr.f32.gmra.mrb[0].mxu0 %v1315
      %v1476 = vpop.f32.mrb[0].mxu0
      %v1477 = vadd.f32 0.0, %v1476
      %v1478 = vpop.f32.mrb[0].mxu0
      %1479 = vmatprep.mubr.f32.mxu0 0.0
      %1480 = vmatmul.mubr.f32.gmra.mrb[0].mxu0 %v1318
      %v1481 = vpop.f32.mrb[0].mxu0
      %v1482 = vadd.f32 0.0, %v1481
      %v1483 = vpop.f32.mrb[0].mxu0
      %1484 = vmatprep.mubr.f32.mxu0 0.0
      %1485 = vmatmul.mubr.f32.gmra.mrb[0].mxu0 %v1321
      %v1486 = vpop.f32.mrb[0].mxu0
      %v1487 = vadd.f32 0.0, %v1486
      %v1488 = vpop.f32.mrb[0].mxu0
      %1489 = vmatprep.mubr.f32.mxu0 0.0
      %1490 = vmatmul.mubr.f32.gmra.mrb[0].mxu0 %v1324
      %v1491 = vpop.f32.mrb[0].mxu0
      %v1492 = vadd.f32 0.0, %v1491
      %v1493 = vpop.f32.mrb[0].mxu0
      %1494 = vmatprep.mubr.f32.mxu0 0.0
      %1495 = vmatmul.mubr.f32.gmra.mrb[0].mxu0 %v1327
      %v1496 = vpop.f32.mrb[0].mxu0
      %v1497 = vadd.f32 0.0, %v1496
      %v1498 = vpop.f32.mrb[0].mxu0
      %1499 = vmatprep.mubr.f32.mxu0 0.0
      %1500 = vmatmul.mubr.f32.gmra.mrb[0].mxu0 %v1330
      %v1501 = vpop.f32.mrb[0].mxu0
      %v1502 = vadd.f32 0.0, %v1501
      %v1503 = vpop.f32.mrb[0].mxu0
      %1504 = vmatprep.mubr.f32.mxu0 0.0
      %1505 = vmatmul.mubr.f32.gmra.mrb[0].mxu0 %v1333
      %v1506 = vpop.f32.mrb[0].mxu0
      %v1507 = vadd.f32 0.0, %v1506
      %v1508 = vpop.f32.mrb[0].mxu0
      %1509 = vmatprep.mubr.f32.mxu0 0.0
      %1510 = vmatmul.mubr.f32.gmra.mrb[0].mxu0 %v1336
      %v1511 = vpop.f32.mrb[0].mxu0
      %v1512 = vadd.f32 0.0, %v1511
      %v1513 = vpop.f32.mrb[0].mxu0
      %1514 = vmatprep.mubr.f32.mxu0 0.0
      %1515 = vmatmul.mubr.f32.gmra.mrb[0].mxu0 %v1339
      %v1516 = vpop.f32.mrb[0].mxu0
      %v1517 = vadd.f32 0.0, %v1516
      %v1518 = vpop.f32.mrb[0].mxu0
      %1519 = vmatprep.mubr.f32.mxu0 0.0
      %1520 = vmatmul.mubr.f32.gmra.mrb[0].mxu0 %v1342
      %v1521 = vpop.f32.mrb[0].mxu0
      %v1522 = vadd.f32 0.0, %v1521
      %v1523 = vpop.f32.mrb[0].mxu0
      %1524 = vmatprep.mubr.f32.mxu0 0.0
      %1525 = vmatmul.mubr.f32.gmra.mrb[0].mxu0 %v1345
      %v1526 = vpop.f32.mrb[0].mxu0
      %v1527 = vadd.f32 0.0, %v1526
      %v1528 = vpop.f32.mrb[0].mxu0
      %1529 = vmatprep.mubr.f32.mxu0 0.0
      %1530 = vmatmul.mubr.f32.gmra.mrb[0].mxu0 %v1348
      %v1531 = vpop.f32.mrb[0].mxu0
      %v1532 = vadd.f32 0.0, %v1531
      %v1533 = vpop.f32.mrb[0].mxu0
      %1534 = vmatprep.mubr.f32.mxu0 0.0
      %1535 = vmatmul.mubr.f32.gmra.mrb[0].mxu0 %v1351
      %v1536 = vpop.f32.mrb[0].mxu0
      %v1537 = vadd.f32 0.0, %v1536
      %v1538 = vpop.f32.mrb[0].mxu0
      %1539 = vmatprep.mubr.f32.mxu0 0.0
      %1540 = vmatmul.mubr.f32.gmra.mrb[0].mxu0 %v1354
      %v1541 = vpop.f32.mrb[0].mxu0
      %v1542 = vadd.f32 0.0, %v1541
      %v1543 = vpop.f32.mrb[0].mxu0
      %1544 = vmatprep.mubr.f32.mxu0 0.0
      %1545 = vmatmul.mubr.f32.gmra.mrb[0].mxu0 %v1357
      %v1546 = vpop.f32.mrb[0].mxu0
      %v1547 = vadd.f32 0.0, %v1546
      %v1548 = vpop.f32.mrb[0].mxu0
      %1549 = vmatprep.mubr.f32.mxu0 0.0
      %1550 = vmatmul.mubr.f32.gmra.mrb[0].mxu0 %v1360
      %v1551 = vpop.f32.mrb[0].mxu0
      %v1552 = vadd.f32 0.0, %v1551
      %v1553 = vpop.f32.mrb[0].mxu0
      %1554 = vmatprep.mubr.f32.mxu0 0.0
      %1555 = vmatmul.mubr.f32.gmra.mrb[0].mxu0 %v1363
      %v1556 = vpop.f32.mrb[0].mxu0
      %v1557 = vadd.f32 0.0, %v1556
      %v1558 = vpop.f32.mrb[0].mxu0
      %1559 = vmatprep.mubr.f32.mxu0 0.0
      %1560 = vmatmul.mubr.f32.gmra.mrb[0].mxu0 %v1366
      %v1561 = vpop.f32.mrb[0].mxu0
      %v1562 = vadd.f32 0.0, %v1561
      %v1563 = vpop.f32.mrb[0].mxu0
      %1564 = vmatprep.mubr.f32.mxu0 0.0
      %1565 = vmatmul.mubr.f32.gmra.mrb[0].mxu0 %v1369
      %v1566 = vpop.f32.mrb[0].mxu0
      %v1567 = vadd.f32 0.0, %v1566
      %v1568 = vpop.f32.mrb[0].mxu0
      %1569 = vmatprep.mubr.f32.mxu0 0.0
      %1570 = vmatmul.mubr.f32.gmra.mrb[0].mxu0 %v1372
      %v1571 = vpop.f32.mrb[0].mxu0
      %v1572 = vadd.f32 0.0, %v1571
      %v1573 = vpop.f32.mrb[0].mxu0
      %1574 = vmatprep.mubr.f32.mxu0 0.0
      %1575 = vmatmul.mubr.f32.gmra.mrb[0].mxu0 %v1375
      %v1576 = vpop.f32.mrb[0].mxu0
      %v1577 = vadd.f32 0.0, %v1576
      %v1578 = vpop.f32.mrb[0].mxu0
      %1579 = vmatprep.mubr.f32.mxu0 0.0
      %1580 = vmatmul.mubr.f32.gmra.mrb[0].mxu0 %v1378
      %v1581 = vpop.f32.mrb[0].mxu0
      %v1582 = vadd.f32 0.0, %v1581
      %v1583 = vpop.f32.mrb[0].mxu0
      %1584 = vmatprep.mubr.f32.mxu0 0.0
      %1585 = vmatmul.mubr.f32.gmra.mrb[0].mxu0 %v1381
      %v1586 = vpop.f32.mrb[0].mxu0
      %v1587 = vadd.f32 0.0, %v1586
      %v1588 = vpop.f32.mrb[0].mxu0
      %1589 = vmatprep.mubr.f32.mxu0 0.0
      %1590 = vmatmul.mubr.f32.gmra.mrb[0].mxu0 %v1384
      %v1591 = vpop.f32.mrb[0].mxu0
      %v1592 = vadd.f32 0.0, %v1591
      %v1593 = vpop.f32.mrb[0].mxu0
      %1594 = vmatprep.mubr.f32.mxu0 0.0
      %1595 = vmatmul.mubr.f32.gmra.mrb[0].mxu0 %v1387
      %v1596 = vpop.f32.mrb[0].mxu0
      %v1597 = vadd.f32 0.0, %v1596
      %v1598 = vpop.f32.mrb[0].mxu0
      %1599 = vmatprep.mubr.f32.mxu0 0.0
      %1600 = vmatmul.mubr.f32.gmra.mrb[0].mxu0 %v1390
      %v1601 = vpop.f32.mrb[0].mxu0
      %v1602 = vadd.f32 0.0, %v1601
      %v1603 = vpop.f32.mrb[0].mxu0
      %1604 = vmatprep.mubr.f32.mxu0 0.0
      %1605 = vmatmul.mubr.f32.gmra.mrb[0].mxu0 %v1393
      %v1606 = vpop.f32.mrb[0].mxu0
      %v1607 = vadd.f32 0.0, %v1606
      %v1608 = vpop.f32.mrb[0].mxu0
      %1609 = vmatprep.mubr.f32.mxu0 0.0
      %1610 = vmatmul.mubr.f32.gmra.mrb[0].mxu0 %v1396
      %v1611 = vpop.f32.mrb[0].mxu0
      %v1612 = vadd.f32 0.0, %v1611
      %v1613 = vpop.f32.mrb[0].mxu0
      %1614 = vmatprep.mubr.f32.mxu0 0.0
      %1615 = vmatmul.mubr.f32.gmra.mrb[0].mxu0 %v1399
      %v1616 = vpop.f32.mrb[0].mxu0
      %v1617 = vadd.f32 0.0, %v1616
      %v1618 = vpop.f32.mrb[0].mxu0
      %1619 = vmatprep.mubr.f32.mxu0 0.0
      %1620 = vmatmul.mubr.f32.gmra.mrb[0].mxu0 %v1402
      %v1621 = vpop.f32.mrb[0].mxu0
      %v1622 = vadd.f32 0.0, %v1621
      %v1623 = vpop.f32.mrb[0].mxu0
      %1624 = vmatprep.mubr.f32.mxu0 0.0
      %1625 = vmatmul.mubr.f32.gmra.mrb[0].mxu0 %v1405
      %v1626 = vpop.f32.mrb[0].mxu0
      %v1627 = vadd.f32 0.0, %v1626
      %v1628 = vpop.f32.mrb[0].mxu0
      %1629 = vmatprep.mubr.f32.mxu0 0.0
      %1630 = vmatmul.mubr.f32.gmra.mrb[0].mxu0 %v1408
      %v1631 = vpop.f32.mrb[0].mxu0
      %v1632 = vadd.f32 0.0, %v1631
      %v1633 = vpop.f32.mrb[0].mxu0
      %1634 = vdwg.mxu0
      %v1635 = vld [vmem:[%s3] sm:$0x1]
      %v1637 = vlaneseq
      %v1638 = vshrl.u32 %v1637, 7
      %v1639 = vsub.s32 0, %v1638
      %v1640 = vrot.slane %v1635, %v1639
      %v1642 = vmul.f32 %v1477, %v1640
      %v1643 = vmul.f32 %v1482, %v1640
      %v1644 = vmul.f32 %v1487, %v1640
      %v1645 = vmul.f32 %v1492, %v1640
      %v1646 = vmul.f32 %v1497, %v1640
      %v1647 = vmul.f32 %v1502, %v1640
      %v1648 = vmul.f32 %v1507, %v1640
      %v1649 = vmul.f32 %v1512, %v1640
      %v1650 = vmul.f32 %v1517, %v1640
      %v1651 = vmul.f32 %v1522, %v1640
      %v1652 = vmul.f32 %v1527, %v1640
      %v1653 = vmul.f32 %v1532, %v1640
      %v1654 = vmul.f32 %v1537, %v1640
      %v1655 = vmul.f32 %v1542, %v1640
      %v1656 = vmul.f32 %v1547, %v1640
      %v1657 = vmul.f32 %v1552, %v1640
      %v1658 = vmul.f32 %v1557, %v1640
      %v1659 = vmul.f32 %v1562, %v1640
      %v1660 = vmul.f32 %v1567, %v1640
      %v1661 = vmul.f32 %v1572, %v1640
      %v1662 = vmul.f32 %v1577, %v1640
      %v1663 = vmul.f32 %v1582, %v1640
      %v1664 = vmul.f32 %v1587, %v1640
      %v1665 = vmul.f32 %v1592, %v1640
      %v1666 = vmul.f32 %v1597, %v1640
      %v1667 = vmul.f32 %v1602, %v1640
      %v1668 = vmul.f32 %v1607, %v1640
      %v1669 = vmul.f32 %v1612, %v1640
      %v1670 = vmul.f32 %v1617, %v1640
      %v1671 = vmul.f32 %v1622, %v1640
      %v1672 = vmul.f32 %v1627, %v1640
      %v1673 = vmul.f32 %v1632, %v1640
      %v1674 = vld [vmem:[%s4] sm:$0x1]
      %v1676 = vlaneseq
      %v1677 = vshrl.u32 %v1676, 7
      %v1678 = vsub.s32 0, %v1677
      %v1679 = vrot.slane %v1674, %v1678
      %v1681 = vadd.f32 %v1642, %v1679
      %v1682 = vadd.f32 %v1643, %v1679
      %v1683 = vadd.f32 %v1644, %v1679
      %v1684 = vadd.f32 %v1645, %v1679
      %v1685 = vadd.f32 %v1646, %v1679
      %v1686 = vadd.f32 %v1647, %v1679
      %v1687 = vadd.f32 %v1648, %v1679
      %v1688 = vadd.f32 %v1649, %v1679
      %v1689 = vadd.f32 %v1650, %v1679
      %v1690 = vadd.f32 %v1651, %v1679
      %v1691 = vadd.f32 %v1652, %v1679
      %v1692 = vadd.f32 %v1653, %v1679
      %v1693 = vadd.f32 %v1654, %v1679
      %v1694 = vadd.f32 %v1655, %v1679
      %v1695 = vadd.f32 %v1656, %v1679
      %v1696 = vadd.f32 %v1657, %v1679
      %v1697 = vadd.f32 %v1658, %v1679
      %v1698 = vadd.f32 %v1659, %v1679
      %v1699 = vadd.f32 %v1660, %v1679
      %v1700 = vadd.f32 %v1661, %v1679
      %v1701 = vadd.f32 %v1662, %v1679
      %v1702 = vadd.f32 %v1663, %v1679
      %v1703 = vadd.f32 %v1664, %v1679
      %v1704 = vadd.f32 %v1665, %v1679
      %v1705 = vadd.f32 %v1666, %v1679
      %v1706 = vadd.f32 %v1667, %v1679
      %v1707 = vadd.f32 %v1668, %v1679
      %v1708 = vadd.f32 %v1669, %v1679
      %v1709 = vadd.f32 %v1670, %v1679
      %v1710 = vadd.f32 %v1671, %v1679
      %v1711 = vadd.f32 %v1672, %v1679
      %v1712 = vadd.f32 %v1673, %v1679
      %v1713 = vmax.f32 %v1681, 0.0
      %v1714 = vmax.f32 %v1682, 0.0
      %v1715 = vmax.f32 %v1683, 0.0
      %v1716 = vmax.f32 %v1684, 0.0
      %v1717 = vmax.f32 %v1685, 0.0
      %v1718 = vmax.f32 %v1686, 0.0
      %v1719 = vmax.f32 %v1687, 0.0
      %v1720 = vmax.f32 %v1688, 0.0
      %v1721 = vmax.f32 %v1689, 0.0
      %v1722 = vmax.f32 %v1690, 0.0
      %v1723 = vmax.f32 %v1691, 0.0
      %v1724 = vmax.f32 %v1692, 0.0
      %v1725 = vmax.f32 %v1693, 0.0
      %v1726 = vmax.f32 %v1694, 0.0
      %v1727 = vmax.f32 %v1695, 0.0
      %v1728 = vmax.f32 %v1696, 0.0
      %v1729 = vmax.f32 %v1697, 0.0
      %v1730 = vmax.f32 %v1698, 0.0
      %v1731 = vmax.f32 %v1699, 0.0
      %v1732 = vmax.f32 %v1700, 0.0
      %v1733 = vmax.f32 %v1701, 0.0
      %v1734 = vmax.f32 %v1702, 0.0
      %v1735 = vmax.f32 %v1703, 0.0
      %v1736 = vmax.f32 %v1704, 0.0
      %v1737 = vmax.f32 %v1705, 0.0
      %v1738 = vmax.f32 %v1706, 0.0
      %v1739 = vmax.f32 %v1707, 0.0
      %v1740 = vmax.f32 %v1708, 0.0
      %v1741 = vmax.f32 %v1709, 0.0
      %v1742 = vmax.f32 %v1710, 0.0
      %v1743 = vmax.f32 %v1711, 0.0
      %v1744 = vmax.f32 %v1712, 0.0
      %s1745 = scalar_lea.vmem [#allocation3], 24
      %1746 = vst.msk [vmem:[%s1745 + $0x1] sm:$0xff] %vm279, %v1713
      %1747 = vst.msk [vmem:[%s1745 + $0x9] sm:$0xff] %vm279, %v1714
      %1748 = vst.msk [vmem:[%s1745 + $0x19] sm:$0xff] %vm279, %v1715
      %1749 = vst.msk [vmem:[%s1745 + $0x21] sm:$0xff] %vm279, %v1716
      %1750 = vst.msk [vmem:[%s1745 + $0x31] sm:$0xff] %vm279, %v1717
      %1751 = vst.msk [vmem:[%s1745 + $0x39] sm:$0xff] %vm279, %v1718
      %1752 = vst.msk [vmem:[%s1745 + $0x49] sm:$0xff] %vm279, %v1719
      %1753 = vst.msk [vmem:[%s1745 + $0x51] sm:$0xff] %vm279, %v1720
      %1754 = vst.msk [vmem:[%s1745 + $0x61] sm:$0xff] %vm279, %v1721
      %1755 = vst.msk [vmem:[%s1745 + $0x69] sm:$0xff] %vm279, %v1722
      %1756 = vst.msk [vmem:[%s1745 + $0x79] sm:$0xff] %vm279, %v1723
      %1757 = vst.msk [vmem:[%s1745 + $0x81] sm:$0xff] %vm279, %v1724
      %1758 = vst.msk [vmem:[%s1745 + $0x91] sm:$0xff] %vm279, %v1725
      %1759 = vst.msk [vmem:[%s1745 + $0x99] sm:$0xff] %vm279, %v1726
      %1760 = vst.msk [vmem:[%s1745 + $0xa9] sm:$0xff] %vm279, %v1727
      %1761 = vst.msk [vmem:[%s1745 + $0xb1] sm:$0xff] %vm279, %v1728
      %1762 = vst.msk [vmem:[%s1745 + $0xc1] sm:$0xff] %vm279, %v1729
      %1763 = vst.msk [vmem:[%s1745 + $0xc9] sm:$0xff] %vm279, %v1730
      %1764 = vst.msk [vmem:[%s1745 + $0xd9] sm:$0xff] %vm279, %v1731
      %1765 = vst.msk [vmem:[%s1745 + $0xe1] sm:$0xff] %vm279, %v1732
      %1766 = vst.msk [vmem:[%s1745 + $0xf1] sm:$0xff] %vm279, %v1733
      %1767 = vst.msk [vmem:[%s1745 + $0xf9] sm:$0xff] %vm279, %v1734
      %1768 = vst.msk [vmem:[%s1745 + $0x109] sm:$0xff] %vm279, %v1735
      %1769 = vst.msk [vmem:[%s1745 + $0x111] sm:$0xff] %vm279, %v1736
      %1770 = vst.msk [vmem:[%s1745 + $0x121] sm:$0xff] %vm279, %v1737
      %1771 = vst.msk [vmem:[%s1745 + $0x129] sm:$0xff] %vm279, %v1738
      %1772 = vst.msk [vmem:[%s1745 + $0x139] sm:$0xff] %vm279, %v1739
      %1773 = vst.msk [vmem:[%s1745 + $0x141] sm:$0xff] %vm279, %v1740
      %1774 = vst.msk [vmem:[%s1745 + $0x151] sm:$0xff] %vm279, %v1741
      %1775 = vst.msk [vmem:[%s1745 + $0x159] sm:$0xff] %vm279, %v1742
      %1776 = vst.msk [vmem:[%s1745 + $0x169] sm:$0xff] %vm279, %v1743
      %1777 = vst.msk [vmem:[%s1745 + $0x171] sm:$0xff] %vm279, %v1744
      %v1778 = vld [vmem:[#allocation3] sm:$0xff]
      %v1779 = vld [vmem:[#allocation3 + $0x8] sm:$0xff]
      %v1780 = vld [vmem:[#allocation3 + $0x10] sm:$0x3]
      %v1781 = vld [vmem:[#allocation3 + $0x18] sm:$0xff]
      %v1782 = vld [vmem:[#allocation3 + $0x20] sm:$0xff]
      %v1783 = vld [vmem:[#allocation3 + $0x28] sm:$0x3]
      %v1784 = vld [vmem:[#allocation3 + $0x30] sm:$0xff]
      %v1785 = vld [vmem:[#allocation3 + $0x38] sm:$0xff]
      %v1786 = vld [vmem:[#allocation3 + $0x40] sm:$0x3]
      %v1787 = vld [vmem:[#allocation3 + $0x48] sm:$0xff]
      %v1788 = vld [vmem:[#allocation3 + $0x50] sm:$0xff]
      %v1789 = vld [vmem:[#allocation3 + $0x58] sm:$0x3]
      %v1790 = vld [vmem:[#allocation3 + $0x60] sm:$0xff]
      %v1791 = vld [vmem:[#allocation3 + $0x68] sm:$0xff]
      %v1792 = vld [vmem:[#allocation3 + $0x70] sm:$0x3]
      %v1793 = vld [vmem:[#allocation3 + $0x78] sm:$0xff]
      %v1794 = vld [vmem:[#allocation3 + $0x80] sm:$0xff]
      %v1795 = vld [vmem:[#allocation3 + $0x88] sm:$0x3]
      %v1796 = vld [vmem:[#allocation3 + $0x90] sm:$0xff]
      %v1797 = vld [vmem:[#allocation3 + $0x98] sm:$0xff]
      %v1798 = vld [vmem:[#allocation3 + $0xa0] sm:$0x3]
      %v1799 = vld [vmem:[#allocation3 + $0xa8] sm:$0xff]
      %v1800 = vld [vmem:[#allocation3 + $0xb0] sm:$0xff]
      %v1801 = vld [vmem:[#allocation3 + $0xb8] sm:$0x3]
      %v1802 = vld [vmem:[#allocation3 + $0xc0] sm:$0xff]
      %v1803 = vld [vmem:[#allocation3 + $0xc8] sm:$0xff]
      %v1804 = vld [vmem:[#allocation3 + $0xd0] sm:$0x3]
      %v1805 = vld [vmem:[#allocation3 + $0xd8] sm:$0xff]
      %v1806 = vld [vmem:[#allocation3 + $0xe0] sm:$0xff]
      %v1807 = vld [vmem:[#allocation3 + $0xe8] sm:$0x3]
      %v1808 = vld [vmem:[#allocation3 + $0xf0] sm:$0xff]
      %v1809 = vld [vmem:[#allocation3 + $0xf8] sm:$0xff]
      %v1810 = vld [vmem:[#allocation3 + $0x100] sm:$0x3]
      %v1811 = vld [vmem:[#allocation3 + $0x108] sm:$0xff]
      %v1812 = vld [vmem:[#allocation3 + $0x110] sm:$0xff]
      %v1813 = vld [vmem:[#allocation3 + $0x118] sm:$0x3]
      %v1814 = vld [vmem:[#allocation3 + $0x120] sm:$0xff]
      %v1815 = vld [vmem:[#allocation3 + $0x128] sm:$0xff]
      %v1816 = vld [vmem:[#allocation3 + $0x130] sm:$0x3]
      %v1817 = vld [vmem:[#allocation3 + $0x138] sm:$0xff]
      %v1818 = vld [vmem:[#allocation3 + $0x140] sm:$0xff]
      %v1819 = vld [vmem:[#allocation3 + $0x148] sm:$0x3]
      %v1820 = vld [vmem:[#allocation3 + $0x150] sm:$0xff]
      %v1821 = vld [vmem:[#allocation3 + $0x158] sm:$0xff]
      %v1822 = vld [vmem:[#allocation3 + $0x160] sm:$0x3]
      %v1823 = vld [vmem:[#allocation3 + $0x168] sm:$0xff]
      %v1824 = vld [vmem:[#allocation3 + $0x170] sm:$0xff]
      %v1825 = vld [vmem:[#allocation3 + $0x178] sm:$0x3]
      %v1826 = vld [vmem:[#allocation3 + $0x180] sm:$0xff]
      %v1827 = vld [vmem:[#allocation3 + $0x188] sm:$0xff]
      %v1828 = vld [vmem:[#allocation3 + $0x190] sm:$0x3]
      %v1829 = vld [vmem:[#allocation3 + $0x198] sm:$0xff]
      %v1830 = vld [vmem:[#allocation3 + $0x1a0] sm:$0xff]
      %v1831 = vld [vmem:[#allocation3 + $0x1a8] sm:$0x3]
      %v1886 = vrot.slane %v1778, 1
      %v1887 = vrot.slane %v1779, 1
      %v1888 = vsel %vm541, %v1886, %v1887
      %v1889 = vrot.slane %v1780, 1
      %v1890 = vsel %vm541, %v1887, %v1889
      %v1891 = vrot.slane %v1781, 1
      %v1892 = vrot.slane %v1782, 1
      %v1893 = vsel %vm541, %v1891, %v1892
      %v1894 = vrot.slane %v1783, 1
      %v1895 = vsel %vm541, %v1892, %v1894
      %v1896 = vrot.slane %v1784, 1
      %v1897 = vrot.slane %v1785, 1
      %v1898 = vsel %vm541, %v1896, %v1897
      %v1899 = vrot.slane %v1786, 1
      %v1900 = vsel %vm541, %v1897, %v1899
      %v1901 = vrot.slane %v1787, 1
      %v1902 = vrot.slane %v1788, 1
      %v1903 = vsel %vm541, %v1901, %v1902
      %v1904 = vrot.slane %v1789, 1
      %v1905 = vsel %vm541, %v1902, %v1904
      %v1906 = vrot.slane %v1790, 1
      %v1907 = vrot.slane %v1791, 1
      %v1908 = vsel %vm541, %v1906, %v1907
      %v1909 = vrot.slane %v1792, 1
      %v1910 = vsel %vm541, %v1907, %v1909
      %v1911 = vrot.slane %v1793, 1
      %v1912 = vrot.slane %v1794, 1
      %v1913 = vsel %vm541, %v1911, %v1912
      %v1914 = vrot.slane %v1795, 1
      %v1915 = vsel %vm541, %v1912, %v1914
      %v1916 = vrot.slane %v1796, 1
      %v1917 = vrot.slane %v1797, 1
      %v1918 = vsel %vm541, %v1916, %v1917
      %v1919 = vrot.slane %v1798, 1
      %v1920 = vsel %vm541, %v1917, %v1919
      %v1921 = vrot.slane %v1799, 1
      %v1922 = vrot.slane %v1800, 1
      %v1923 = vsel %vm541, %v1921, %v1922
      %v1924 = vrot.slane %v1801, 1
      %v1925 = vsel %vm541, %v1922, %v1924
      %v1926 = vrot.slane %v1802, 1
      %v1927 = vrot.slane %v1803, 1
      %v1928 = vsel %vm541, %v1926, %v1927
      %v1929 = vrot.slane %v1804, 1
      %v1930 = vsel %vm541, %v1927, %v1929
      %v1931 = vrot.slane %v1805, 1
      %v1932 = vrot.slane %v1806, 1
      %v1933 = vsel %vm541, %v1931, %v1932
      %v1934 = vrot.slane %v1807, 1
      %v1935 = vsel %vm541, %v1932, %v1934
      %v1936 = vrot.slane %v1808, 1
      %v1937 = vrot.slane %v1809, 1
      %v1938 = vsel %vm541, %v1936, %v1937
      %v1939 = vrot.slane %v1810, 1
      %v1940 = vsel %vm541, %v1937, %v1939
      %v1941 = vrot.slane %v1811, 1
      %v1942 = vrot.slane %v1812, 1
      %v1943 = vsel %vm541, %v1941, %v1942
      %v1944 = vrot.slane %v1813, 1
      %v1945 = vsel %vm541, %v1942, %v1944
      %v1946 = vrot.slane %v1814, 1
      %v1947 = vrot.slane %v1815, 1
      %v1948 = vsel %vm541, %v1946, %v1947
      %v1949 = vrot.slane %v1816, 1
      %v1950 = vsel %vm541, %v1947, %v1949
      %v1951 = vrot.slane %v1817, 1
      %v1952 = vrot.slane %v1818, 1
      %v1953 = vsel %vm541, %v1951, %v1952
      %v1954 = vrot.slane %v1819, 1
      %v1955 = vsel %vm541, %v1952, %v1954
      %v1956 = vrot.slane %v1820, 1
      %v1957 = vrot.slane %v1821, 1
      %v1958 = vsel %vm541, %v1956, %v1957
      %v1959 = vrot.slane %v1822, 1
      %v1960 = vsel %vm541, %v1957, %v1959
      %v1961 = vrot.slane %v1823, 1
      %v1962 = vrot.slane %v1824, 1
      %v1963 = vsel %vm541, %v1961, %v1962
      %v1964 = vrot.slane %v1825, 1
      %v1965 = vsel %vm541, %v1962, %v1964
      %v1966 = vrot.slane %v1826, 1
      %v1967 = vrot.slane %v1827, 1
      %v1968 = vsel %vm541, %v1966, %v1967
      %v1969 = vrot.slane %v1828, 1
      %v1970 = vsel %vm541, %v1967, %v1969
      %v1971 = vrot.slane %v1829, 1
      %v1972 = vrot.slane %v1830, 1
      %v1973 = vsel %vm541, %v1971, %v1972
      %v1974 = vrot.slane %v1831, 1
      %v1975 = vsel %vm541, %v1972, %v1974
      %1976 = vrot.lane.b32.xlu0 %v1888, 8
      %v1977 = vpop.permute.xlu0 %1976
      %1978 = vrot.lane.b32.xlu0 %v1890, 8
      %v1979 = vpop.permute.xlu0 %1978
      %1980 = vrot.lane.b32.xlu0 %v1893, 8
      %v1981 = vpop.permute.xlu0 %1980
      %1982 = vrot.lane.b32.xlu0 %v1895, 8
      %v1983 = vpop.permute.xlu0 %1982
      %1984 = vrot.lane.b32.xlu0 %v1898, 8
      %v1985 = vpop.permute.xlu0 %1984
      %1986 = vrot.lane.b32.xlu0 %v1900, 8
      %v1987 = vpop.permute.xlu0 %1986
      %1988 = vrot.lane.b32.xlu0 %v1903, 8
      %v1989 = vpop.permute.xlu0 %1988
      %1990 = vrot.lane.b32.xlu0 %v1905, 8
      %v1991 = vpop.permute.xlu0 %1990
      %1992 = vrot.lane.b32.xlu0 %v1908, 8
      %v1993 = vpop.permute.xlu0 %1992
      %1994 = vrot.lane.b32.xlu0 %v1910, 8
      %v1995 = vpop.permute.xlu0 %1994
      %1996 = vrot.lane.b32.xlu0 %v1913, 8
      %v1997 = vpop.permute.xlu0 %1996
      %1998 = vrot.lane.b32.xlu0 %v1915, 8
      %v1999 = vpop.permute.xlu0 %1998
      %2000 = vrot.lane.b32.xlu0 %v1918, 8
      %v2001 = vpop.permute.xlu0 %2000
      %2002 = vrot.lane.b32.xlu0 %v1920, 8
      %v2003 = vpop.permute.xlu0 %2002
      %2004 = vrot.lane.b32.xlu0 %v1923, 8
      %v2005 = vpop.permute.xlu0 %2004
      %2006 = vrot.lane.b32.xlu0 %v1925, 8
      %v2007 = vpop.permute.xlu0 %2006
      %2008 = vrot.lane.b32.xlu0 %v1928, 8
      %v2009 = vpop.permute.xlu0 %2008
      %2010 = vrot.lane.b32.xlu0 %v1930, 8
      %v2011 = vpop.permute.xlu0 %2010
      %2012 = vrot.lane.b32.xlu0 %v1933, 8
      %v2013 = vpop.permute.xlu0 %2012
      %2014 = vrot.lane.b32.xlu0 %v1935, 8
      %v2015 = vpop.permute.xlu0 %2014
      %2016 = vrot.lane.b32.xlu0 %v1938, 8
      %v2017 = vpop.permute.xlu0 %2016
      %2018 = vrot.lane.b32.xlu0 %v1940, 8
      %v2019 = vpop.permute.xlu0 %2018
      %2020 = vrot.lane.b32.xlu0 %v1943, 8
      %v2021 = vpop.permute.xlu0 %2020
      %2022 = vrot.lane.b32.xlu0 %v1945, 8
      %v2023 = vpop.permute.xlu0 %2022
      %2024 = vrot.lane.b32.xlu0 %v1948, 8
      %v2025 = vpop.permute.xlu0 %2024
      %2026 = vrot.lane.b32.xlu0 %v1950, 8
      %v2027 = vpop.permute.xlu0 %2026
      %2028 = vrot.lane.b32.xlu0 %v1953, 8
      %v2029 = vpop.permute.xlu0 %2028
      %2030 = vrot.lane.b32.xlu0 %v1955, 8
      %v2031 = vpop.permute.xlu0 %2030
      %2032 = vrot.lane.b32.xlu0 %v1958, 8
      %v2033 = vpop.permute.xlu0 %2032
      %2034 = vrot.lane.b32.xlu0 %v1960, 8
      %v2035 = vpop.permute.xlu0 %2034
      %2036 = vrot.lane.b32.xlu0 %v1963, 8
      %v2037 = vpop.permute.xlu0 %2036
      %2038 = vrot.lane.b32.xlu0 %v1965, 8
      %v2039 = vpop.permute.xlu0 %2038
      %2040 = vrot.lane.b32.xlu0 %v1968, 8
      %v2041 = vpop.permute.xlu0 %2040
      %2042 = vrot.lane.b32.xlu0 %v1970, 8
      %v2043 = vpop.permute.xlu0 %2042
      %2044 = vrot.lane.b32.xlu0 %v1973, 8
      %v2045 = vpop.permute.xlu0 %2044
      %2046 = vrot.lane.b32.xlu0 %v1975, 8
      %v2047 = vpop.permute.xlu0 %2046
      %v2084 = vrot.slane %v1778, 2
      %v2085 = vrot.slane %v1779, 2
      %v2086 = vsel %vm740, %v2084, %v2085
      %v2087 = vrot.slane %v1780, 2
      %v2088 = vsel %vm740, %v2085, %v2087
      %v2089 = vrot.slane %v1781, 2
      %v2090 = vrot.slane %v1782, 2
      %v2091 = vsel %vm740, %v2089, %v2090
      %v2092 = vrot.slane %v1783, 2
      %v2093 = vsel %vm740, %v2090, %v2092
      %v2094 = vrot.slane %v1784, 2
      %v2095 = vrot.slane %v1785, 2
      %v2096 = vsel %vm740, %v2094, %v2095
      %v2097 = vrot.slane %v1786, 2
      %v2098 = vsel %vm740, %v2095, %v2097
      %v2099 = vrot.slane %v1787, 2
      %v2100 = vrot.slane %v1788, 2
      %v2101 = vsel %vm740, %v2099, %v2100
      %v2102 = vrot.slane %v1789, 2
      %v2103 = vsel %vm740, %v2100, %v2102
      %v2104 = vrot.slane %v1790, 2
      %v2105 = vrot.slane %v1791, 2
      %v2106 = vsel %vm740, %v2104, %v2105
      %v2107 = vrot.slane %v1792, 2
      %v2108 = vsel %vm740, %v2105, %v2107
      %v2109 = vrot.slane %v1793, 2
      %v2110 = vrot.slane %v1794, 2
      %v2111 = vsel %vm740, %v2109, %v2110
      %v2112 = vrot.slane %v1795, 2
      %v2113 = vsel %vm740, %v2110, %v2112
      %v2114 = vrot.slane %v1796, 2
      %v2115 = vrot.slane %v1797, 2
      %v2116 = vsel %vm740, %v2114, %v2115
      %v2117 = vrot.slane %v1798, 2
      %v2118 = vsel %vm740, %v2115, %v2117
      %v2119 = vrot.slane %v1799, 2
      %v2120 = vrot.slane %v1800, 2
      %v2121 = vsel %vm740, %v2119, %v2120
      %v2122 = vrot.slane %v1801, 2
      %v2123 = vsel %vm740, %v2120, %v2122
      %v2124 = vrot.slane %v1802, 2
      %v2125 = vrot.slane %v1803, 2
      %v2126 = vsel %vm740, %v2124, %v2125
      %v2127 = vrot.slane %v1804, 2
      %v2128 = vsel %vm740, %v2125, %v2127
      %v2129 = vrot.slane %v1805, 2
      %v2130 = vrot.slane %v1806, 2
      %v2131 = vsel %vm740, %v2129, %v2130
      %v2132 = vrot.slane %v1807, 2
      %v2133 = vsel %vm740, %v2130, %v2132
      %v2134 = vrot.slane %v1808, 2
      %v2135 = vrot.slane %v1809, 2
      %v2136 = vsel %vm740, %v2134, %v2135
      %v2137 = vrot.slane %v1810, 2
      %v2138 = vsel %vm740, %v2135, %v2137
      %v2139 = vrot.slane %v1811, 2
      %v2140 = vrot.slane %v1812, 2
      %v2141 = vsel %vm740, %v2139, %v2140
      %v2142 = vrot.slane %v1813, 2
      %v2143 = vsel %vm740, %v2140, %v2142
      %v2144 = vrot.slane %v1814, 2
      %v2145 = vrot.slane %v1815, 2
      %v2146 = vsel %vm740, %v2144, %v2145
      %v2147 = vrot.slane %v1816, 2
      %v2148 = vsel %vm740, %v2145, %v2147
      %v2149 = vrot.slane %v1817, 2
      %v2150 = vrot.slane %v1818, 2
      %v2151 = vsel %vm740, %v2149, %v2150
      %v2152 = vrot.slane %v1819, 2
      %v2153 = vsel %vm740, %v2150, %v2152
      %v2154 = vrot.slane %v1820, 2
      %v2155 = vrot.slane %v1821, 2
      %v2156 = vsel %vm740, %v2154, %v2155
      %v2157 = vrot.slane %v1822, 2
      %v2158 = vsel %vm740, %v2155, %v2157
      %v2159 = vrot.slane %v1823, 2
      %v2160 = vrot.slane %v1824, 2
      %v2161 = vsel %vm740, %v2159, %v2160
      %v2162 = vrot.slane %v1825, 2
      %v2163 = vsel %vm740, %v2160, %v2162
      %v2164 = vrot.slane %v1826, 2
      %v2165 = vrot.slane %v1827, 2
      %v2166 = vsel %vm740, %v2164, %v2165
      %v2167 = vrot.slane %v1828, 2
      %v2168 = vsel %vm740, %v2165, %v2167
      %v2169 = vrot.slane %v1829, 2
      %v2170 = vrot.slane %v1830, 2
      %v2171 = vsel %vm740, %v2169, %v2170
      %v2172 = vrot.slane %v1831, 2
      %v2173 = vsel %vm740, %v2170, %v2172
      %2174 = vrot.lane.b32.xlu0 %v2086, 16
      %v2175 = vpop.permute.xlu0 %2174
      %2176 = vrot.lane.b32.xlu0 %v2088, 16
      %v2177 = vpop.permute.xlu0 %2176
      %2178 = vrot.lane.b32.xlu0 %v2091, 16
      %v2179 = vpop.permute.xlu0 %2178
      %2180 = vrot.lane.b32.xlu0 %v2093, 16
      %v2181 = vpop.permute.xlu0 %2180
      %2182 = vrot.lane.b32.xlu0 %v2096, 16
      %v2183 = vpop.permute.xlu0 %2182
      %2184 = vrot.lane.b32.xlu0 %v2098, 16
      %v2185 = vpop.permute.xlu0 %2184
      %2186 = vrot.lane.b32.xlu0 %v2101, 16
      %v2187 = vpop.permute.xlu0 %2186
      %2188 = vrot.lane.b32.xlu0 %v2103, 16
      %v2189 = vpop.permute.xlu0 %2188
      %2190 = vrot.lane.b32.xlu0 %v2106, 16
      %v2191 = vpop.permute.xlu0 %2190
      %2192 = vrot.lane.b32.xlu0 %v2108, 16
      %v2193 = vpop.permute.xlu0 %2192
      %2194 = vrot.lane.b32.xlu0 %v2111, 16
      %v2195 = vpop.permute.xlu0 %2194
      %2196 = vrot.lane.b32.xlu0 %v2113, 16
      %v2197 = vpop.permute.xlu0 %2196
      %2198 = vrot.lane.b32.xlu0 %v2116, 16
      %v2199 = vpop.permute.xlu0 %2198
      %2200 = vrot.lane.b32.xlu0 %v2118, 16
      %v2201 = vpop.permute.xlu0 %2200
      %2202 = vrot.lane.b32.xlu0 %v2121, 16
      %v2203 = vpop.permute.xlu0 %2202
      %2204 = vrot.lane.b32.xlu0 %v2123, 16
      %v2205 = vpop.permute.xlu0 %2204
      %2206 = vrot.lane.b32.xlu0 %v2126, 16
      %v2207 = vpop.permute.xlu0 %2206
      %2208 = vrot.lane.b32.xlu0 %v2128, 16
      %v2209 = vpop.permute.xlu0 %2208
      %2210 = vrot.lane.b32.xlu0 %v2131, 16
      %v2211 = vpop.permute.xlu0 %2210
      %2212 = vrot.lane.b32.xlu0 %v2133, 16
      %v2213 = vpop.permute.xlu0 %2212
      %2214 = vrot.lane.b32.xlu0 %v2136, 16
      %v2215 = vpop.permute.xlu0 %2214
      %2216 = vrot.lane.b32.xlu0 %v2138, 16
      %v2217 = vpop.permute.xlu0 %2216
      %2218 = vrot.lane.b32.xlu0 %v2141, 16
      %v2219 = vpop.permute.xlu0 %2218
      %2220 = vrot.lane.b32.xlu0 %v2143, 16
      %v2221 = vpop.permute.xlu0 %2220
      %2222 = vrot.lane.b32.xlu0 %v2146, 16
      %v2223 = vpop.permute.xlu0 %2222
      %2224 = vrot.lane.b32.xlu0 %v2148, 16
      %v2225 = vpop.permute.xlu0 %2224
      %2226 = vrot.lane.b32.xlu0 %v2151, 16
      %v2227 = vpop.permute.xlu0 %2226
      %2228 = vrot.lane.b32.xlu0 %v2153, 16
      %v2229 = vpop.permute.xlu0 %2228
      %2230 = vrot.lane.b32.xlu0 %v2156, 16
      %v2231 = vpop.permute.xlu0 %2230
      %2232 = vrot.lane.b32.xlu0 %v2158, 16
      %v2233 = vpop.permute.xlu0 %2232
      %2234 = vrot.lane.b32.xlu0 %v2161, 16
      %v2235 = vpop.permute.xlu0 %2234
      %2236 = vrot.lane.b32.xlu0 %v2163, 16
      %v2237 = vpop.permute.xlu0 %2236
      %2238 = vrot.lane.b32.xlu0 %v2166, 16
      %v2239 = vpop.permute.xlu0 %2238
      %2240 = vrot.lane.b32.xlu0 %v2168, 16
      %v2241 = vpop.permute.xlu0 %2240
      %2242 = vrot.lane.b32.xlu0 %v2171, 16
      %v2243 = vpop.permute.xlu0 %2242
      %2244 = vrot.lane.b32.xlu0 %v2173, 16
      %v2245 = vpop.permute.xlu0 %2244
      %v2282 = vsel %vm279, %v1778, %v1977
      %v2283 = vsel %vm279, %v1779, %v1979
      %v2284 = vsel %vm279, %v1781, %v1981
      %v2285 = vsel %vm279, %v1782, %v1983
      %v2286 = vsel %vm279, %v1784, %v1985
      %v2287 = vsel %vm279, %v1785, %v1987
      %v2288 = vsel %vm279, %v1787, %v1989
      %v2289 = vsel %vm279, %v1788, %v1991
      %v2290 = vsel %vm279, %v1790, %v1993
      %v2291 = vsel %vm279, %v1791, %v1995
      %v2292 = vsel %vm279, %v1793, %v1997
      %v2293 = vsel %vm279, %v1794, %v1999
      %v2294 = vsel %vm279, %v1796, %v2001
      %v2295 = vsel %vm279, %v1797, %v2003
      %v2296 = vsel %vm279, %v1799, %v2005
      %v2297 = vsel %vm279, %v1800, %v2007
      %v2298 = vsel %vm279, %v1802, %v2009
      %v2299 = vsel %vm279, %v1803, %v2011
      %v2300 = vsel %vm279, %v1805, %v2013
      %v2301 = vsel %vm279, %v1806, %v2015
      %v2302 = vsel %vm279, %v1808, %v2017
      %v2303 = vsel %vm279, %v1809, %v2019
      %v2304 = vsel %vm279, %v1811, %v2021
      %v2305 = vsel %vm279, %v1812, %v2023
      %v2306 = vsel %vm279, %v1814, %v2025
      %v2307 = vsel %vm279, %v1815, %v2027
      %v2308 = vsel %vm279, %v1817, %v2029
      %v2309 = vsel %vm279, %v1818, %v2031
      %v2310 = vsel %vm279, %v1820, %v2033
      %v2311 = vsel %vm279, %v1821, %v2035
      %v2312 = vsel %vm279, %v1823, %v2037
      %v2313 = vsel %vm279, %v1824, %v2039
      %v2314 = vsel %vm279, %v1826, %v2041
      %v2315 = vsel %vm279, %v1827, %v2043
      %v2316 = vsel %vm279, %v1829, %v2045
      %v2317 = vsel %vm279, %v1830, %v2047
      %v2318 = vsel %vm975, %v2282, %v2175
      %v2319 = vsel %vm975, %v2283, %v2177
      %v2320 = vsel %vm975, %v2284, %v2179
      %v2321 = vsel %vm975, %v2285, %v2181
      %v2322 = vsel %vm975, %v2286, %v2183
      %v2323 = vsel %vm975, %v2287, %v2185
      %v2324 = vsel %vm975, %v2288, %v2187
      %v2325 = vsel %vm975, %v2289, %v2189
      %v2326 = vsel %vm975, %v2290, %v2191
      %v2327 = vsel %vm975, %v2291, %v2193
      %v2328 = vsel %vm975, %v2292, %v2195
      %v2329 = vsel %vm975, %v2293, %v2197
      %v2330 = vsel %vm975, %v2294, %v2199
      %v2331 = vsel %vm975, %v2295, %v2201
      %v2332 = vsel %vm975, %v2296, %v2203
      %v2333 = vsel %vm975, %v2297, %v2205
      %v2334 = vsel %vm975, %v2298, %v2207
      %v2335 = vsel %vm975, %v2299, %v2209
      %v2336 = vsel %vm975, %v2300, %v2211
      %v2337 = vsel %vm975, %v2301, %v2213
      %v2338 = vsel %vm975, %v2302, %v2215
      %v2339 = vsel %vm975, %v2303, %v2217
      %v2340 = vsel %vm975, %v2304, %v2219
      %v2341 = vsel %vm975, %v2305, %v2221
      %v2342 = vsel %vm975, %v2306, %v2223
      %v2343 = vsel %vm975, %v2307, %v2225
      %v2344 = vsel %vm975, %v2308, %v2227
      %v2345 = vsel %vm975, %v2309, %v2229
      %v2346 = vsel %vm975, %v2310, %v2231
      %v2347 = vsel %vm975, %v2311, %v2233
      %v2348 = vsel %vm975, %v2312, %v2235
      %v2349 = vsel %vm975, %v2313, %v2237
      %v2350 = vsel %vm975, %v2314, %v2239
      %v2351 = vsel %vm975, %v2315, %v2241
      %v2352 = vsel %vm975, %v2316, %v2243
      %v2353 = vsel %vm975, %v2317, %v2245
      %2386 = vrot.lane.b32.xlu0 %v2320, 24
      %v2387 = vpop.permute.xlu0 %2386
      %2388 = vrot.lane.b32.xlu0 %v2321, 24
      %v2389 = vpop.permute.xlu0 %2388
      %2390 = vrot.lane.b32.xlu0 %v2322, 24
      %v2391 = vpop.permute.xlu0 %2390
      %2392 = vrot.lane.b32.xlu0 %v2323, 24
      %v2393 = vpop.permute.xlu0 %2392
      %2394 = vrot.lane.b32.xlu0 %v2324, 24
      %v2395 = vpop.permute.xlu0 %2394
      %2396 = vrot.lane.b32.xlu0 %v2325, 24
      %v2397 = vpop.permute.xlu0 %2396
      %2398 = vrot.lane.b32.xlu0 %v2326, 24
      %v2399 = vpop.permute.xlu0 %2398
      %2400 = vrot.lane.b32.xlu0 %v2327, 24
      %v2401 = vpop.permute.xlu0 %2400
      %2402 = vrot.lane.b32.xlu0 %v2328, 24
      %v2403 = vpop.permute.xlu0 %2402
      %2404 = vrot.lane.b32.xlu0 %v2329, 24
      %v2405 = vpop.permute.xlu0 %2404
      %2406 = vrot.lane.b32.xlu0 %v2330, 24
      %v2407 = vpop.permute.xlu0 %2406
      %2408 = vrot.lane.b32.xlu0 %v2331, 24
      %v2409 = vpop.permute.xlu0 %2408
      %2410 = vrot.lane.b32.xlu0 %v2332, 24
      %v2411 = vpop.permute.xlu0 %2410
      %2412 = vrot.lane.b32.xlu0 %v2333, 24
      %v2413 = vpop.permute.xlu0 %2412
      %2414 = vrot.lane.b32.xlu0 %v2334, 24
      %v2415 = vpop.permute.xlu0 %2414
      %2416 = vrot.lane.b32.xlu0 %v2335, 24
      %v2417 = vpop.permute.xlu0 %2416
      %2418 = vrot.lane.b32.xlu0 %v2336, 24
      %v2419 = vpop.permute.xlu0 %2418
      %2420 = vrot.lane.b32.xlu0 %v2337, 24
      %v2421 = vpop.permute.xlu0 %2420
      %2422 = vrot.lane.b32.xlu0 %v2338, 24
      %v2423 = vpop.permute.xlu0 %2422
      %2424 = vrot.lane.b32.xlu0 %v2339, 24
      %v2425 = vpop.permute.xlu0 %2424
      %2426 = vrot.lane.b32.xlu0 %v2340, 24
      %v2427 = vpop.permute.xlu0 %2426
      %2428 = vrot.lane.b32.xlu0 %v2341, 24
      %v2429 = vpop.permute.xlu0 %2428
      %2430 = vrot.lane.b32.xlu0 %v2342, 24
      %v2431 = vpop.permute.xlu0 %2430
      %2432 = vrot.lane.b32.xlu0 %v2343, 24
      %v2433 = vpop.permute.xlu0 %2432
      %2434 = vrot.lane.b32.xlu0 %v2344, 24
      %v2435 = vpop.permute.xlu0 %2434
      %2436 = vrot.lane.b32.xlu0 %v2345, 24
      %v2437 = vpop.permute.xlu0 %2436
      %2438 = vrot.lane.b32.xlu0 %v2346, 24
      %v2439 = vpop.permute.xlu0 %2438
      %2440 = vrot.lane.b32.xlu0 %v2347, 24
      %v2441 = vpop.permute.xlu0 %2440
      %2442 = vrot.lane.b32.xlu0 %v2348, 24
      %v2443 = vpop.permute.xlu0 %2442
      %2444 = vrot.lane.b32.xlu0 %v2349, 24
      %v2445 = vpop.permute.xlu0 %2444
      %2446 = vrot.lane.b32.xlu0 %v2350, 24
      %v2447 = vpop.permute.xlu0 %2446
      %2448 = vrot.lane.b32.xlu0 %v2351, 24
      %v2449 = vpop.permute.xlu0 %2448
      %2484 = vrot.lane.b32.xlu0 %v2322, 48
      %v2485 = vpop.permute.xlu0 %2484
      %2486 = vrot.lane.b32.xlu0 %v2323, 48
      %v2487 = vpop.permute.xlu0 %2486
      %2488 = vrot.lane.b32.xlu0 %v2324, 48
      %v2489 = vpop.permute.xlu0 %2488
      %2490 = vrot.lane.b32.xlu0 %v2325, 48
      %v2491 = vpop.permute.xlu0 %2490
      %2492 = vrot.lane.b32.xlu0 %v2326, 48
      %v2493 = vpop.permute.xlu0 %2492
      %2494 = vrot.lane.b32.xlu0 %v2327, 48
      %v2495 = vpop.permute.xlu0 %2494
      %2496 = vrot.lane.b32.xlu0 %v2328, 48
      %v2497 = vpop.permute.xlu0 %2496
      %2498 = vrot.lane.b32.xlu0 %v2329, 48
      %v2499 = vpop.permute.xlu0 %2498
      %2500 = vrot.lane.b32.xlu0 %v2330, 48
      %v2501 = vpop.permute.xlu0 %2500
      %2502 = vrot.lane.b32.xlu0 %v2331, 48
      %v2503 = vpop.permute.xlu0 %2502
      %2504 = vrot.lane.b32.xlu0 %v2332, 48
      %v2505 = vpop.permute.xlu0 %2504
      %2506 = vrot.lane.b32.xlu0 %v2333, 48
      %v2507 = vpop.permute.xlu0 %2506
      %2508 = vrot.lane.b32.xlu0 %v2334, 48
      %v2509 = vpop.permute.xlu0 %2508
      %2510 = vrot.lane.b32.xlu0 %v2335, 48
      %v2511 = vpop.permute.xlu0 %2510
      %2512 = vrot.lane.b32.xlu0 %v2336, 48
      %v2513 = vpop.permute.xlu0 %2512
      %2514 = vrot.lane.b32.xlu0 %v2337, 48
      %v2515 = vpop.permute.xlu0 %2514
      %2516 = vrot.lane.b32.xlu0 %v2338, 48
      %v2517 = vpop.permute.xlu0 %2516
      %2518 = vrot.lane.b32.xlu0 %v2339, 48
      %v2519 = vpop.permute.xlu0 %2518
      %2520 = vrot.lane.b32.xlu0 %v2340, 48
      %v2521 = vpop.permute.xlu0 %2520
      %2522 = vrot.lane.b32.xlu0 %v2341, 48
      %v2523 = vpop.permute.xlu0 %2522
      %2524 = vrot.lane.b32.xlu0 %v2342, 48
      %v2525 = vpop.permute.xlu0 %2524
      %2526 = vrot.lane.b32.xlu0 %v2343, 48
      %v2527 = vpop.permute.xlu0 %2526
      %2528 = vrot.lane.b32.xlu0 %v2344, 48
      %v2529 = vpop.permute.xlu0 %2528
      %2530 = vrot.lane.b32.xlu0 %v2345, 48
      %v2531 = vpop.permute.xlu0 %2530
      %2532 = vrot.lane.b32.xlu0 %v2346, 48
      %v2533 = vpop.permute.xlu0 %2532
      %2534 = vrot.lane.b32.xlu0 %v2347, 48
      %v2535 = vpop.permute.xlu0 %2534
      %2536 = vrot.lane.b32.xlu0 %v2348, 48
      %v2537 = vpop.permute.xlu0 %2536
      %2538 = vrot.lane.b32.xlu0 %v2349, 48
      %v2539 = vpop.permute.xlu0 %2538
      %2540 = vrot.lane.b32.xlu0 %v2350, 48
      %v2541 = vpop.permute.xlu0 %2540
      %2542 = vrot.lane.b32.xlu0 %v2351, 48
      %v2543 = vpop.permute.xlu0 %2542
      %2544 = vrot.lane.b32.xlu0 %v2352, 48
      %v2545 = vpop.permute.xlu0 %2544
      %2546 = vrot.lane.b32.xlu0 %v2353, 48
      %v2547 = vpop.permute.xlu0 %2546
      %v2580 = vsel %vm1238, %v2318, %v2387
      %v2581 = vsel %vm1238, %v2319, %v2389
      %v2582 = vsel %vm1238, %v2320, %v2391
      %v2583 = vsel %vm1238, %v2321, %v2393
      %v2584 = vsel %vm1238, %v2322, %v2395
      %v2585 = vsel %vm1238, %v2323, %v2397
      %v2586 = vsel %vm1238, %v2324, %v2399
      %v2587 = vsel %vm1238, %v2325, %v2401
      %v2588 = vsel %vm1238, %v2326, %v2403
      %v2589 = vsel %vm1238, %v2327, %v2405
      %v2590 = vsel %vm1238, %v2328, %v2407
      %v2591 = vsel %vm1238, %v2329, %v2409
      %v2592 = vsel %vm1238, %v2330, %v2411
      %v2593 = vsel %vm1238, %v2331, %v2413
      %v2594 = vsel %vm1238, %v2332, %v2415
      %v2595 = vsel %vm1238, %v2333, %v2417
      %v2596 = vsel %vm1238, %v2334, %v2419
      %v2597 = vsel %vm1238, %v2335, %v2421
      %v2598 = vsel %vm1238, %v2336, %v2423
      %v2599 = vsel %vm1238, %v2337, %v2425
      %v2600 = vsel %vm1238, %v2338, %v2427
      %v2601 = vsel %vm1238, %v2339, %v2429
      %v2602 = vsel %vm1238, %v2340, %v2431
      %v2603 = vsel %vm1238, %v2341, %v2433
      %v2604 = vsel %vm1238, %v2342, %v2435
      %v2605 = vsel %vm1238, %v2343, %v2437
      %v2606 = vsel %vm1238, %v2344, %v2439
      %v2607 = vsel %vm1238, %v2345, %v2441
      %v2608 = vsel %vm1238, %v2346, %v2443
      %v2609 = vsel %vm1238, %v2347, %v2445
      %v2610 = vsel %vm1238, %v2348, %v2447
      %v2611 = vsel %vm1238, %v2349, %v2449
      %v2612 = vsel %vm1271, %v2580, %v2485
      %v2613 = vsel %vm1271, %v2581, %v2487
      %v2614 = vsel %vm1271, %v2582, %v2489
      %v2615 = vsel %vm1271, %v2583, %v2491
      %v2616 = vsel %vm1271, %v2584, %v2493
      %v2617 = vsel %vm1271, %v2585, %v2495
      %v2618 = vsel %vm1271, %v2586, %v2497
      %v2619 = vsel %vm1271, %v2587, %v2499
      %v2620 = vsel %vm1271, %v2588, %v2501
      %v2621 = vsel %vm1271, %v2589, %v2503
      %v2622 = vsel %vm1271, %v2590, %v2505
      %v2623 = vsel %vm1271, %v2591, %v2507
      %v2624 = vsel %vm1271, %v2592, %v2509
      %v2625 = vsel %vm1271, %v2593, %v2511
      %v2626 = vsel %vm1271, %v2594, %v2513
      %v2627 = vsel %vm1271, %v2595, %v2515
      %v2628 = vsel %vm1271, %v2596, %v2517
      %v2629 = vsel %vm1271, %v2597, %v2519
      %v2630 = vsel %vm1271, %v2598, %v2521
      %v2631 = vsel %vm1271, %v2599, %v2523
      %v2632 = vsel %vm1271, %v2600, %v2525
      %v2633 = vsel %vm1271, %v2601, %v2527
      %v2634 = vsel %vm1271, %v2602, %v2529
      %v2635 = vsel %vm1271, %v2603, %v2531
      %v2636 = vsel %vm1271, %v2604, %v2533
      %v2637 = vsel %vm1271, %v2605, %v2535
      %v2638 = vsel %vm1271, %v2606, %v2537
      %v2639 = vsel %vm1271, %v2607, %v2539
      %v2640 = vsel %vm1271, %v2608, %v2541
      %v2641 = vsel %vm1271, %v2609, %v2543
      %v2642 = vsel %vm1271, %v2610, %v2545
      %v2643 = vsel %vm1271, %v2611, %v2547
      %v2644 = vld [vmem:[%s2] sm:$0xff]
      %v2645 = vld [vmem:[%s2 + $0x8] sm:$0xff]
      %v2646 = vld [vmem:[%s2 + $0x10] sm:$0xff]
      %v2647 = vld [vmem:[%s2 + $0x18] sm:$0xff]
      %v2648 = vld [vmem:[%s2 + $0x20] sm:$0xff]
      %v2649 = vld [vmem:[%s2 + $0x28] sm:$0xff]
      %v2650 = vld [vmem:[%s2 + $0x30] sm:$0xff]
      %v2651 = vld [vmem:[%s2 + $0x38] sm:$0xff]
      %v2652 = vld [vmem:[%s2 + $0x40] sm:$0xff]
      %v2654 = vsel %vm1313, %v2612, 0
      %v2657 = vsel %vm1313, %v2613, 0
      %v2660 = vsel %vm1313, %v2614, 0
      %v2663 = vsel %vm1313, %v2615, 0
      %v2666 = vsel %vm1313, %v2616, 0
      %v2669 = vsel %vm1313, %v2617, 0
      %v2672 = vsel %vm1313, %v2618, 0
      %v2675 = vsel %vm1313, %v2619, 0
      %v2678 = vsel %vm1313, %v2620, 0
      %v2681 = vsel %vm1313, %v2621, 0
      %v2684 = vsel %vm1313, %v2622, 0
      %v2687 = vsel %vm1313, %v2623, 0
      %v2690 = vsel %vm1313, %v2624, 0
      %v2693 = vsel %vm1313, %v2625, 0
      %v2696 = vsel %vm1313, %v2626, 0
      %v2699 = vsel %vm1313, %v2627, 0
      %v2702 = vsel %vm1313, %v2628, 0
      %v2705 = vsel %vm1313, %v2629, 0
      %v2708 = vsel %vm1313, %v2630, 0
      %v2711 = vsel %vm1313, %v2631, 0
      %v2714 = vsel %vm1313, %v2632, 0
      %v2717 = vsel %vm1313, %v2633, 0
      %v2720 = vsel %vm1313, %v2634, 0
      %v2723 = vsel %vm1313, %v2635, 0
      %v2726 = vsel %vm1313, %v2636, 0
      %v2729 = vsel %vm1313, %v2637, 0
      %v2732 = vsel %vm1313, %v2638, 0
      %v2735 = vsel %vm1313, %v2639, 0
      %v2738 = vsel %vm1313, %v2640, 0
      %v2741 = vsel %vm1313, %v2641, 0
      %v2744 = vsel %vm1313, %v2642, 0
      %v2747 = vsel %vm1313, %v2643, 0
      %2749 = vmatprep.subr.mxu0 0.0
      %2750 = vmatpush1.msra.mxu0 %v2644
      %2751 = vmatprep.subr.mxu0 0.0
      %2752 = vmatpush1.msra.mxu0 %v2645
      %2753 = vmatprep.subr.mxu0 0.0
      %2754 = vmatpush1.msra.mxu0 %v2646
      %2755 = vmatprep.subr.mxu0 0.0
      %2756 = vmatpush1.msra.mxu0 %v2647
      %2757 = vmatprep.subr.mxu0 0.0
      %2758 = vmatpush1.msra.mxu0 %v2648
      %2759 = vmatprep.subr.mxu0 0.0
      %2760 = vmatpush1.msra.mxu0 %v2649
      %2761 = vmatprep.subr.mxu0 0.0
      %2762 = vmatpush1.msra.mxu0 %v2650
      %2763 = vmatprep.subr.mxu0 0.0
      %2764 = vmatpush1.msra.mxu0 %v2651
      %2765 = vmatprep.subr.mxu0 0.0
      %2766 = vmatpush1.msra.mxu0 %v2652
      %2767 = vmatprep.subr.mxu0 0.0
      %2768 = vmatpush1.msra.mxu0 0.0
      %2769 = vmatprep.subr.mxu0 0.0
      %2770 = vmatpush1.msra.mxu0 0.0
      %2771 = vmatprep.subr.mxu0 0.0
      %2772 = vmatpush1.msra.mxu0 0.0
      %2773 = vmatprep.subr.mxu0 0.0
      %2774 = vmatpush1.msra.mxu0 0.0
      %2775 = vmatprep.subr.mxu0 0.0
      %2776 = vmatpush1.msra.mxu0 0.0
      %2777 = vmatprep.subr.mxu0 0.0
      %2778 = vmatpush1.msra.mxu0 0.0
      %2779 = vmatprep.subr.mxu0 0.0
      %2780 = vmatpush1.msra.mxu0 0.0
      %2781 = vmatprep.subr.mxu0 0.0
      %2782 = vmatpush1.msra.mxu0 0.0
      %2783 = vmatprep.subr.mxu0 0.0
      %2784 = vmatpush1.msra.mxu0 0.0
      %2785 = vmatprep.subr.mxu0 0.0
      %2786 = vmatpush1.msra.mxu0 0.0
      %2787 = vmatprep.subr.mxu0 0.0
      %2788 = vmatpush1.msra.mxu0 0.0
      %2789 = vmatprep.subr.mxu0 0.0
      %2790 = vmatpush1.msra.mxu0 0.0
      %2791 = vmatprep.subr.mxu0 0.0
      %2792 = vmatpush1.msra.mxu0 0.0
      %2793 = vmatprep.subr.mxu0 0.0
      %2794 = vmatpush1.msra.mxu0 0.0
      %2795 = vmatprep.subr.mxu0 0.0
      %2796 = vmatpush1.msra.mxu0 0.0
      %2797 = vmatprep.subr.mxu0 0.0
      %2798 = vmatpush1.msra.mxu0 0.0
      %2799 = vmatprep.subr.mxu0 0.0
      %2800 = vmatpush1.msra.mxu0 0.0
      %2801 = vmatprep.subr.mxu0 0.0
      %2802 = vmatpush1.msra.mxu0 0.0
      %2803 = vmatprep.subr.mxu0 0.0
      %2804 = vmatpush1.msra.mxu0 0.0
      %2805 = vmatprep.subr.mxu0 0.0
      %2806 = vmatpush1.msra.mxu0 0.0
      %2807 = vmatprep.subr.mxu0 0.0
      %2808 = vmatpush1.msra.mxu0 0.0
      %2809 = vmatprep.subr.mxu0 0.0
      %2810 = vmatpush1.msra.mxu0 0.0
      %2811 = vmatprep.subr.mxu0 0.0
      %2812 = vmatpush1.msra.mxu0 0.0
      %2813 = vmatprep.mubr.f32.mxu0 0.0
      %2814 = vmatmul.mubr.f32.gmra.mrb[0].mxu0 %v2654
      %v2815 = vpop.f32.mrb[0].mxu0
      %v2816 = vadd.f32 0.0, %v2815
      %v2817 = vpop.f32.mrb[0].mxu0
      %2818 = vmatprep.mubr.f32.mxu0 0.0
      %2819 = vmatmul.mubr.f32.gmra.mrb[0].mxu0 %v2657
      %v2820 = vpop.f32.mrb[0].mxu0
      %v2821 = vadd.f32 0.0, %v2820
      %v2822 = vpop.f32.mrb[0].mxu0
      %2823 = vmatprep.mubr.f32.mxu0 0.0
      %2824 = vmatmul.mubr.f32.gmra.mrb[0].mxu0 %v2660
      %v2825 = vpop.f32.mrb[0].mxu0
      %v2826 = vadd.f32 0.0, %v2825
      %v2827 = vpop.f32.mrb[0].mxu0
      %2828 = vmatprep.mubr.f32.mxu0 0.0
      %2829 = vmatmul.mubr.f32.gmra.mrb[0].mxu0 %v2663
      %v2830 = vpop.f32.mrb[0].mxu0
      %v2831 = vadd.f32 0.0, %v2830
      %v2832 = vpop.f32.mrb[0].mxu0
      %2833 = vmatprep.mubr.f32.mxu0 0.0
      %2834 = vmatmul.mubr.f32.gmra.mrb[0].mxu0 %v2666
      %v2835 = vpop.f32.mrb[0].mxu0
      %v2836 = vadd.f32 0.0, %v2835
      %v2837 = vpop.f32.mrb[0].mxu0
      %2838 = vmatprep.mubr.f32.mxu0 0.0
      %2839 = vmatmul.mubr.f32.gmra.mrb[0].mxu0 %v2669
      %v2840 = vpop.f32.mrb[0].mxu0
      %v2841 = vadd.f32 0.0, %v2840
      %v2842 = vpop.f32.mrb[0].mxu0
      %2843 = vmatprep.mubr.f32.mxu0 0.0
      %2844 = vmatmul.mubr.f32.gmra.mrb[0].mxu0 %v2672
      %v2845 = vpop.f32.mrb[0].mxu0
      %v2846 = vadd.f32 0.0, %v2845
      %v2847 = vpop.f32.mrb[0].mxu0
      %2848 = vmatprep.mubr.f32.mxu0 0.0
      %2849 = vmatmul.mubr.f32.gmra.mrb[0].mxu0 %v2675
      %v2850 = vpop.f32.mrb[0].mxu0
      %v2851 = vadd.f32 0.0, %v2850
      %v2852 = vpop.f32.mrb[0].mxu0
      %2853 = vmatprep.mubr.f32.mxu0 0.0
      %2854 = vmatmul.mubr.f32.gmra.mrb[0].mxu0 %v2678
      %v2855 = vpop.f32.mrb[0].mxu0
      %v2856 = vadd.f32 0.0, %v2855
      %v2857 = vpop.f32.mrb[0].mxu0
      %2858 = vmatprep.mubr.f32.mxu0 0.0
      %2859 = vmatmul.mubr.f32.gmra.mrb[0].mxu0 %v2681
      %v2860 = vpop.f32.mrb[0].mxu0
      %v2861 = vadd.f32 0.0, %v2860
      %v2862 = vpop.f32.mrb[0].mxu0
      %2863 = vmatprep.mubr.f32.mxu0 0.0
      %2864 = vmatmul.mubr.f32.gmra.mrb[0].mxu0 %v2684
      %v2865 = vpop.f32.mrb[0].mxu0
      %v2866 = vadd.f32 0.0, %v2865
      %v2867 = vpop.f32.mrb[0].mxu0
      %2868 = vmatprep.mubr.f32.mxu0 0.0
      %2869 = vmatmul.mubr.f32.gmra.mrb[0].mxu0 %v2687
      %v2870 = vpop.f32.mrb[0].mxu0
      %v2871 = vadd.f32 0.0, %v2870
      %v2872 = vpop.f32.mrb[0].mxu0
      %2873 = vmatprep.mubr.f32.mxu0 0.0
      %2874 = vmatmul.mubr.f32.gmra.mrb[0].mxu0 %v2690
      %v2875 = vpop.f32.mrb[0].mxu0
      %v2876 = vadd.f32 0.0, %v2875
      %v2877 = vpop.f32.mrb[0].mxu0
      %2878 = vmatprep.mubr.f32.mxu0 0.0
      %2879 = vmatmul.mubr.f32.gmra.mrb[0].mxu0 %v2693
      %v2880 = vpop.f32.mrb[0].mxu0
      %v2881 = vadd.f32 0.0, %v2880
      %v2882 = vpop.f32.mrb[0].mxu0
      %2883 = vmatprep.mubr.f32.mxu0 0.0
      %2884 = vmatmul.mubr.f32.gmra.mrb[0].mxu0 %v2696
      %v2885 = vpop.f32.mrb[0].mxu0
      %v2886 = vadd.f32 0.0, %v2885
      %v2887 = vpop.f32.mrb[0].mxu0
      %2888 = vmatprep.mubr.f32.mxu0 0.0
      %2889 = vmatmul.mubr.f32.gmra.mrb[0].mxu0 %v2699
      %v2890 = vpop.f32.mrb[0].mxu0
      %v2891 = vadd.f32 0.0, %v2890
      %v2892 = vpop.f32.mrb[0].mxu0
      %2893 = vmatprep.mubr.f32.mxu0 0.0
      %2894 = vmatmul.mubr.f32.gmra.mrb[0].mxu0 %v2702
      %v2895 = vpop.f32.mrb[0].mxu0
      %v2896 = vadd.f32 0.0, %v2895
      %v2897 = vpop.f32.mrb[0].mxu0
      %2898 = vmatprep.mubr.f32.mxu0 0.0
      %2899 = vmatmul.mubr.f32.gmra.mrb[0].mxu0 %v2705
      %v2900 = vpop.f32.mrb[0].mxu0
      %v2901 = vadd.f32 0.0, %v2900
      %v2902 = vpop.f32.mrb[0].mxu0
      %2903 = vmatprep.mubr.f32.mxu0 0.0
      %2904 = vmatmul.mubr.f32.gmra.mrb[0].mxu0 %v2708
      %v2905 = vpop.f32.mrb[0].mxu0
      %v2906 = vadd.f32 0.0, %v2905
      %v2907 = vpop.f32.mrb[0].mxu0
      %2908 = vmatprep.mubr.f32.mxu0 0.0
      %2909 = vmatmul.mubr.f32.gmra.mrb[0].mxu0 %v2711
      %v2910 = vpop.f32.mrb[0].mxu0
      %v2911 = vadd.f32 0.0, %v2910
      %v2912 = vpop.f32.mrb[0].mxu0
      %2913 = vmatprep.mubr.f32.mxu0 0.0
      %2914 = vmatmul.mubr.f32.gmra.mrb[0].mxu0 %v2714
      %v2915 = vpop.f32.mrb[0].mxu0
      %v2916 = vadd.f32 0.0, %v2915
      %v2917 = vpop.f32.mrb[0].mxu0
      %2918 = vmatprep.mubr.f32.mxu0 0.0
      %2919 = vmatmul.mubr.f32.gmra.mrb[0].mxu0 %v2717
      %v2920 = vpop.f32.mrb[0].mxu0
      %v2921 = vadd.f32 0.0, %v2920
      %v2922 = vpop.f32.mrb[0].mxu0
      %2923 = vmatprep.mubr.f32.mxu0 0.0
      %2924 = vmatmul.mubr.f32.gmra.mrb[0].mxu0 %v2720
      %v2925 = vpop.f32.mrb[0].mxu0
      %v2926 = vadd.f32 0.0, %v2925
      %v2927 = vpop.f32.mrb[0].mxu0
      %2928 = vmatprep.mubr.f32.mxu0 0.0
      %2929 = vmatmul.mubr.f32.gmra.mrb[0].mxu0 %v2723
      %v2930 = vpop.f32.mrb[0].mxu0
      %v2931 = vadd.f32 0.0, %v2930
      %v2932 = vpop.f32.mrb[0].mxu0
      %2933 = vmatprep.mubr.f32.mxu0 0.0
      %2934 = vmatmul.mubr.f32.gmra.mrb[0].mxu0 %v2726
      %v2935 = vpop.f32.mrb[0].mxu0
      %v2936 = vadd.f32 0.0, %v2935
      %v2937 = vpop.f32.mrb[0].mxu0
      %2938 = vmatprep.mubr.f32.mxu0 0.0
      %2939 = vmatmul.mubr.f32.gmra.mrb[0].mxu0 %v2729
      %v2940 = vpop.f32.mrb[0].mxu0
      %v2941 = vadd.f32 0.0, %v2940
      %v2942 = vpop.f32.mrb[0].mxu0
      %2943 = vmatprep.mubr.f32.mxu0 0.0
      %2944 = vmatmul.mubr.f32.gmra.mrb[0].mxu0 %v2732
      %v2945 = vpop.f32.mrb[0].mxu0
      %v2946 = vadd.f32 0.0, %v2945
      %v2947 = vpop.f32.mrb[0].mxu0
      %2948 = vmatprep.mubr.f32.mxu0 0.0
      %2949 = vmatmul.mubr.f32.gmra.mrb[0].mxu0 %v2735
      %v2950 = vpop.f32.mrb[0].mxu0
      %v2951 = vadd.f32 0.0, %v2950
      %v2952 = vpop.f32.mrb[0].mxu0
      %2953 = vmatprep.mubr.f32.mxu0 0.0
      %2954 = vmatmul.mubr.f32.gmra.mrb[0].mxu0 %v2738
      %v2955 = vpop.f32.mrb[0].mxu0
      %v2956 = vadd.f32 0.0, %v2955
      %v2957 = vpop.f32.mrb[0].mxu0
      %2958 = vmatprep.mubr.f32.mxu0 0.0
      %2959 = vmatmul.mubr.f32.gmra.mrb[0].mxu0 %v2741
      %v2960 = vpop.f32.mrb[0].mxu0
      %v2961 = vadd.f32 0.0, %v2960
      %v2962 = vpop.f32.mrb[0].mxu0
      %2963 = vmatprep.mubr.f32.mxu0 0.0
      %2964 = vmatmul.mubr.f32.gmra.mrb[0].mxu0 %v2744
      %v2965 = vpop.f32.mrb[0].mxu0
      %v2966 = vadd.f32 0.0, %v2965
      %v2967 = vpop.f32.mrb[0].mxu0
      %2968 = vmatprep.mubr.f32.mxu0 0.0
      %2969 = vmatmul.mubr.f32.gmra.mrb[0].mxu0 %v2747
      %v2970 = vpop.f32.mrb[0].mxu0
      %v2971 = vadd.f32 0.0, %v2970
      %v2972 = vpop.f32.mrb[0].mxu0
      %2973 = vdwg.mxu0
      %v2974 = vld [vmem:[%s5] sm:$0x1]
      %v2976 = vlaneseq
      %v2977 = vshrl.u32 %v2976, 7
      %v2978 = vsub.s32 0, %v2977
      %v2979 = vrot.slane %v2974, %v2978
      %v2981 = vmul.f32 %v2816, %v2979
      %v2982 = vmul.f32 %v2821, %v2979
      %v2983 = vmul.f32 %v2826, %v2979
      %v2984 = vmul.f32 %v2831, %v2979
      %v2985 = vmul.f32 %v2836, %v2979
      %v2986 = vmul.f32 %v2841, %v2979
      %v2987 = vmul.f32 %v2846, %v2979
      %v2988 = vmul.f32 %v2851, %v2979
      %v2989 = vmul.f32 %v2856, %v2979
      %v2990 = vmul.f32 %v2861, %v2979
      %v2991 = vmul.f32 %v2866, %v2979
      %v2992 = vmul.f32 %v2871, %v2979
      %v2993 = vmul.f32 %v2876, %v2979
      %v2994 = vmul.f32 %v2881, %v2979
      %v2995 = vmul.f32 %v2886, %v2979
      %v2996 = vmul.f32 %v2891, %v2979
      %v2997 = vmul.f32 %v2896, %v2979
      %v2998 = vmul.f32 %v2901, %v2979
      %v2999 = vmul.f32 %v2906, %v2979
      %v3000 = vmul.f32 %v2911, %v2979
      %v3001 = vmul.f32 %v2916, %v2979
      %v3002 = vmul.f32 %v2921, %v2979
      %v3003 = vmul.f32 %v2926, %v2979
      %v3004 = vmul.f32 %v2931, %v2979
      %v3005 = vmul.f32 %v2936, %v2979
      %v3006 = vmul.f32 %v2941, %v2979
      %v3007 = vmul.f32 %v2946, %v2979
      %v3008 = vmul.f32 %v2951, %v2979
      %v3009 = vmul.f32 %v2956, %v2979
      %v3010 = vmul.f32 %v2961, %v2979
      %v3011 = vmul.f32 %v2966, %v2979
      %v3012 = vmul.f32 %v2971, %v2979
      %v3013 = vld [vmem:[%s6] sm:$0x1]
      %v3015 = vlaneseq
      %v3016 = vshrl.u32 %v3015, 7
      %v3017 = vsub.s32 0, %v3016
      %v3018 = vrot.slane %v3013, %v3017
      %v3020 = vadd.f32 %v2981, %v3018
      %v3021 = vadd.f32 %v2982, %v3018
      %v3022 = vadd.f32 %v2983, %v3018
      %v3023 = vadd.f32 %v2984, %v3018
      %v3024 = vadd.f32 %v2985, %v3018
      %v3025 = vadd.f32 %v2986, %v3018
      %v3026 = vadd.f32 %v2987, %v3018
      %v3027 = vadd.f32 %v2988, %v3018
      %v3028 = vadd.f32 %v2989, %v3018
      %v3029 = vadd.f32 %v2990, %v3018
      %v3030 = vadd.f32 %v2991, %v3018
      %v3031 = vadd.f32 %v2992, %v3018
      %v3032 = vadd.f32 %v2993, %v3018
      %v3033 = vadd.f32 %v2994, %v3018
      %v3034 = vadd.f32 %v2995, %v3018
      %v3035 = vadd.f32 %v2996, %v3018
      %v3036 = vadd.f32 %v2997, %v3018
      %v3037 = vadd.f32 %v2998, %v3018
      %v3038 = vadd.f32 %v2999, %v3018
      %v3039 = vadd.f32 %v3000, %v3018
      %v3040 = vadd.f32 %v3001, %v3018
      %v3041 = vadd.f32 %v3002, %v3018
      %v3042 = vadd.f32 %v3003, %v3018
      %v3043 = vadd.f32 %v3004, %v3018
      %v3044 = vadd.f32 %v3005, %v3018
      %v3045 = vadd.f32 %v3006, %v3018
      %v3046 = vadd.f32 %v3007, %v3018
      %v3047 = vadd.f32 %v3008, %v3018
      %v3048 = vadd.f32 %v3009, %v3018
      %v3049 = vadd.f32 %v3010, %v3018
      %v3050 = vadd.f32 %v3011, %v3018
      %v3051 = vadd.f32 %v3012, %v3018
      %v3052 = vadd.f32 %v3020, %v368
      %v3053 = vadd.f32 %v3021, %v369
      %v3054 = vadd.f32 %v3022, %v370
      %v3055 = vadd.f32 %v3023, %v371
      %v3056 = vadd.f32 %v3024, %v372
      %v3057 = vadd.f32 %v3025, %v373
      %v3058 = vadd.f32 %v3026, %v374
      %v3059 = vadd.f32 %v3027, %v375
      %v3060 = vadd.f32 %v3028, %v376
      %v3061 = vadd.f32 %v3029, %v377
      %v3062 = vadd.f32 %v3030, %v378
      %v3063 = vadd.f32 %v3031, %v379
      %v3064 = vadd.f32 %v3032, %v380
      %v3065 = vadd.f32 %v3033, %v381
      %v3066 = vadd.f32 %v3034, %v382
      %v3067 = vadd.f32 %v3035, %v383
      %v3068 = vadd.f32 %v3036, %v384
      %v3069 = vadd.f32 %v3037, %v385
      %v3070 = vadd.f32 %v3038, %v386
      %v3071 = vadd.f32 %v3039, %v387
      %v3072 = vadd.f32 %v3040, %v388
      %v3073 = vadd.f32 %v3041, %v389
      %v3074 = vadd.f32 %v3042, %v390
      %v3075 = vadd.f32 %v3043, %v391
      %v3076 = vadd.f32 %v3044, %v392
      %v3077 = vadd.f32 %v3045, %v393
      %v3078 = vadd.f32 %v3046, %v394
      %v3079 = vadd.f32 %v3047, %v395
      %v3080 = vadd.f32 %v3048, %v396
      %v3081 = vadd.f32 %v3049, %v397
      %v3082 = vadd.f32 %v3050, %v398
      %v3083 = vadd.f32 %v3051, %v399
      %v3084 = vmax.f32 %v3052, 0.0
      %v3085 = vmax.f32 %v3053, 0.0
      %v3086 = vmax.f32 %v3054, 0.0
      %v3087 = vmax.f32 %v3055, 0.0
      %v3088 = vmax.f32 %v3056, 0.0
      %v3089 = vmax.f32 %v3057, 0.0
      %v3090 = vmax.f32 %v3058, 0.0
      %v3091 = vmax.f32 %v3059, 0.0
      %v3092 = vmax.f32 %v3060, 0.0
      %v3093 = vmax.f32 %v3061, 0.0
      %v3094 = vmax.f32 %v3062, 0.0
      %v3095 = vmax.f32 %v3063, 0.0
      %v3096 = vmax.f32 %v3064, 0.0
      %v3097 = vmax.f32 %v3065, 0.0
      %v3098 = vmax.f32 %v3066, 0.0
      %v3099 = vmax.f32 %v3067, 0.0
      %v3100 = vmax.f32 %v3068, 0.0
      %v3101 = vmax.f32 %v3069, 0.0
      %v3102 = vmax.f32 %v3070, 0.0
      %v3103 = vmax.f32 %v3071, 0.0
      %v3104 = vmax.f32 %v3072, 0.0
      %v3105 = vmax.f32 %v3073, 0.0
      %v3106 = vmax.f32 %v3074, 0.0
      %v3107 = vmax.f32 %v3075, 0.0
      %v3108 = vmax.f32 %v3076, 0.0
      %v3109 = vmax.f32 %v3077, 0.0
      %v3110 = vmax.f32 %v3078, 0.0
      %v3111 = vmax.f32 %v3079, 0.0
      %v3112 = vmax.f32 %v3080, 0.0
      %v3113 = vmax.f32 %v3081, 0.0
      %v3114 = vmax.f32 %v3082, 0.0
      %v3115 = vmax.f32 %v3083, 0.0
      %3116 = vst.msk [vmem:[%s278] sm:$0xff] %vm279, %v3084
      %3117 = vst.msk [vmem:[%s278 + $0x8] sm:$0xff] %vm279, %v3085
      %3118 = vst.msk [vmem:[%s278 + $0x10] sm:$0xff] %vm279, %v3086
      %3119 = vst.msk [vmem:[%s278 + $0x18] sm:$0xff] %vm279, %v3087
      %3120 = vst.msk [vmem:[%s278 + $0x20] sm:$0xff] %vm279, %v3088
      %3121 = vst.msk [vmem:[%s278 + $0x28] sm:$0xff] %vm279, %v3089
      %3122 = vst.msk [vmem:[%s278 + $0x30] sm:$0xff] %vm279, %v3090
      %3123 = vst.msk [vmem:[%s278 + $0x38] sm:$0xff] %vm279, %v3091
      %3124 = vst.msk [vmem:[%s278 + $0x40] sm:$0xff] %vm279, %v3092
      %3125 = vst.msk [vmem:[%s278 + $0x48] sm:$0xff] %vm279, %v3093
      %3126 = vst.msk [vmem:[%s278 + $0x50] sm:$0xff] %vm279, %v3094
      %3127 = vst.msk [vmem:[%s278 + $0x58] sm:$0xff] %vm279, %v3095
      %3128 = vst.msk [vmem:[%s278 + $0x60] sm:$0xff] %vm279, %v3096
      %3129 = vst.msk [vmem:[%s278 + $0x68] sm:$0xff] %vm279, %v3097
      %3130 = vst.msk [vmem:[%s278 + $0x70] sm:$0xff] %vm279, %v3098
      %3131 = vst.msk [vmem:[%s278 + $0x78] sm:$0xff] %vm279, %v3099
      %3132 = vst.msk [vmem:[%s278 + $0x80] sm:$0xff] %vm279, %v3100
      %3133 = vst.msk [vmem:[%s278 + $0x88] sm:$0xff] %vm279, %v3101
      %3134 = vst.msk [vmem:[%s278 + $0x90] sm:$0xff] %vm279, %v3102
      %3135 = vst.msk [vmem:[%s278 + $0x98] sm:$0xff] %vm279, %v3103
      %3136 = vst.msk [vmem:[%s278 + $0xa0] sm:$0xff] %vm279, %v3104
      %3137 = vst.msk [vmem:[%s278 + $0xa8] sm:$0xff] %vm279, %v3105
      %3138 = vst.msk [vmem:[%s278 + $0xb0] sm:$0xff] %vm279, %v3106
      %3139 = vst.msk [vmem:[%s278 + $0xb8] sm:$0xff] %vm279, %v3107
      %3140 = vst.msk [vmem:[%s278 + $0xc0] sm:$0xff] %vm279, %v3108
      %3141 = vst.msk [vmem:[%s278 + $0xc8] sm:$0xff] %vm279, %v3109
      %3142 = vst.msk [vmem:[%s278 + $0xd0] sm:$0xff] %vm279, %v3110
      %3143 = vst.msk [vmem:[%s278 + $0xd8] sm:$0xff] %vm279, %v3111
      %3144 = vst.msk [vmem:[%s278 + $0xe0] sm:$0xff] %vm279, %v3112
      %3145 = vst.msk [vmem:[%s278 + $0xe8] sm:$0xff] %vm279, %v3113
      %3146 = vst.msk [vmem:[%s278 + $0xf0] sm:$0xff] %vm279, %v3114
      %3147 = vst.msk [vmem:[%s278 + $0xf8] sm:$0xff] %vm279, %v3115
      %p3148 = scmp.lt.s32.totalorder %s18, 1
      %s3149 = scalar_select %p3148, %s18, 1
      %s3150 = smul.addr %s3149, 32
      %s3151 = smul.addr %s3150, 8
      %s3152 = scalar_lea.vmem %s7, %s3151
      // Predicated region
      $region49: #{tpu_custom_call.1} parent=47 // pred_check
        %p3153 = pneg %p188
      $region50: #{tpu_custom_call.1} parent=47 // pred_check_branch
        %3155 = sbr.rel (%p3153) target = $region52
      $region51: #{tpu_custom_call.1} parent=47 // pred_region
        _
      $region52: #{tpu_custom_call.1} parent=47 // pred_fallthru
        _
    $region48: #{tpu_custom_call.1} parent=5 // pred_fallthru
      _
    %p3156 = scmp.le.s32.totalorder 2, %s13
    // Predicated region
    $region53: #{tpu_custom_call.1} parent=5 // pred_check
      %p3157 = pneg %p3156
    $region54: #{tpu_custom_call.1} parent=5 // pred_check_branch
      %3159 = sbr.rel (%p3157) target = $region56
    $region55: #{tpu_custom_call.1} parent=5 // pred_region
      %s3160 = ssub.s32 %s13, 2
      // Predicated region
      $region57: #{tpu_custom_call.1} parent=55 // pred_check
        %p3161 = pneg %p194
      $region58: #{tpu_custom_call.1} parent=55 // pred_check_branch
        %3163 = sbr.rel (%p3161) target = $region60
      $region59: #{tpu_custom_call.1} parent=55 // pred_region
        %p3164 = scmp.lt.s32.totalorder %s19, 1
        %s3165 = scalar_select %p3164, %s19, 1
        %s3166 = smul.addr %s3165, 32
        %s3167 = smul.addr %s3166, 8
        %s3168 = scalar_lea.vmem %s7, %s3167
      $region60: #{tpu_custom_call.1} parent=55 // pred_fallthru
        _
    $region56: #{tpu_custom_call.1} parent=5 // pred_fallthru
      _
  $region6: #{tpu_custom_call.1} parent=0 // loop_footer
    %s17 = sadd.s32 1, %s13
  $region7: #{tpu_custom_call.1} parent=0 // loop_footer_branch
    %12 = sbr.rel target = $region3
  $region8: #{tpu_custom_call.1} parent=0 // loop_exit
    _

</llo_original>
